<compile_context>
chip_gen: v6e
topology: v6e:2x2x1
jax: 0.10.0
libtpu: 0.0.40
codegen_flags: <defaults>
</compile_context>

<pallas_src>
import functools

import numpy as np
import jax
import jax.numpy as jnp
from jax.experimental import pallas as pl
from jax.experimental.pallas import tpu as pltpu

_LANES = 128
_LABEL_OFFSET = 128.0      # labels stored as (label - 128) so they never win the row max
_PAD_LABEL = -1            # sentinel label for padded sample slots (never matches a class)
_TILE_ROWS_CAP = 8192      # packed rows per grid step (= 32768 samples at classes=30)


def _constants(classes, s):
    """Small 0/1 matrices driving the in-kernel MXU tricks (built once, static)."""
    width = s * classes
    lane = np.arange(_LANES)
    # bdiag[i, j] == 1 iff logits-lane i belongs to the segment whose softmax
    # denominator column j wants.  Junk columns (j >= width) reuse segment 0 so
    # their denominator is never zero (keeps the ignored columns NaN-free).
    col_seg = np.where(lane < width, lane // classes, 0)
    bdiag = ((lane[:, None] // classes) == col_seg[None, :]) & (lane[:, None] < width)
    # lsel[i, j] == 1 iff j is a logits lane and i is the lane holding the
    # (offset) label of j's sample slot.
    lsel = np.zeros((_LANES, _LANES), np.float32)
    for j in range(width):
        lsel[width + j // classes, j] = 1.0
    # Per-lane class id, offset exactly like the stored labels; non-logit lanes
    # get a sentinel that never matches any stored label value.
    cls = np.where(lane < width, (lane % classes) - _LABEL_OFFSET, 1.0)
    return (bdiag.astype(np.float32), lsel, cls.astype(np.float32)[None, :])


def _f1_loss_kernel(x_ref, ones_ref, bdiag_ref, lsel_ref, cls_ref, tp_ref, sp_ref):
    i = pl.program_id(0)

    @pl.when(i == 0)
    def _init():
        tp_ref[...] = jnp.zeros_like(tp_ref)
        sp_ref[...] = jnp.zeros_like(sp_ref)

    x = x_ref[...]                                     # (TN, 128) f32, lane-dense

    # Shared per-row max over all 128 lanes.  Labels/filler are stored offset by
    # -128 so they never dominate realistic logits; softmax is invariant to the
    # shared shift, so the result is exact unless one packed segment underflows.
    # TODO(synk): exact per-segment max (masked pltpu.roll tree or 4 lane-slice
    # reduces) would remove the >~87-logit-spread-between-packed-samples caveat.
    m = jnp.max(x, axis=1, keepdims=True)              # (TN, 1)   XLU reduce
    e = jnp.exp(x - m)                                 # (TN, 128) EUP

    # Per-segment softmax denominator, broadcast to every lane of its segment,
    # via a 0/1 block-diagonal matmul on the otherwise idle MXU (f32-accurate).
    denom = jnp.dot(e, bdiag_ref[...],
                    preferred_element_type=jnp.float32,
                    precision=jax.lax.Precision.HIGHEST)
    p = e / denom                                      # softmax on the logits lanes

    # Broadcast each sample's (offset) label across its segment via a 0/1
    # selector matmul (exact: small integers x {0,1}), then one-hot by equality
    # against the per-lane class id.  Padded samples hold a sentinel -> no hit.
    lbl = jnp.dot(x, lsel_ref[...], preferred_element_type=jnp.float32)
    hit = lbl == cls_ref[...]                          # (TN, 128) bool
    tpm = jnp.where(hit, p, 0.0)

    # Column sums on the MXU instead of VPU vreg-add chains: ones(8,TN) @ X.
    # All 8 accumulator rows hold the same full column sum; wrapper reads row 0.
    ones8 = ones_ref[...]
    tp_ref[...] += jnp.dot(ones8, tpm, preferred_element_type=jnp.float32,
                           precision=jax.lax.Precision.HIGHEST)
    sp_ref[...] += jnp.dot(ones8, p, preferred_element_type=jnp.float32,
                           precision=jax.lax.Precision.HIGHEST)


@functools.partial(jax.jit, static_argnames=("classes", "epsilon", "tile_rows_cap"))
def f1_loss(y_pred, y_true, classes=30, epsilon=1e-7, tile_rows_cap=_TILE_ROWS_CAP):
    """Pallas TPU implementation of F1Loss.forward.

    y_pred: (N, classes) float logits
    y_true: (N,) integer class indices in [0, classes)
    returns: scalar float32 loss = 1 - mean(clamped macro F1)
    """
    assert y_pred.ndim == 2
    assert y_true.ndim == 1
    n, c = y_pred.shape
    assert c == classes
    assert y_true.shape[0] == n
    assert 1 <= classes <= 127
    assert tile_rows_cap % 8 == 0 and tile_rows_cap >= 8

    s = _LANES // (classes + 1)        # samples packed per 128-lane row (4 @ C=30)
    width = s * classes                # logits lanes per packed row (120 @ C=30)

    # ---- pack (N,C) logits + (N,) labels into lane-dense (M,128) rows:
    #      [ s*C logits | s offset labels | filler ]
    m_rows = -(-n // s)
    if m_rows <= tile_rows_cap:
        tile_rows = max(8, ((m_rows + 7) // 8) * 8)
        m_pad = tile_rows
    else:
        tile_rows = tile_rows_cap
        m_pad = -(-m_rows // tile_rows) * tile_rows
    grid = (m_pad // tile_rows,)
    n_fake = m_pad * s - n             # padded sample slots (zero logits, sentinel label)

    logits = jnp.pad(y_pred.astype(jnp.float32), ((0, n_fake), (0, 0)))
    labels = jnp.pad(y_true.astype(jnp.int32), ((0, n_fake),),
                     constant_values=_PAD_LABEL)
    packed = jnp.concatenate(
        [logits.reshape(m_pad, width),
         labels.reshape(m_pad, s).astype(jnp.float32) - _LABEL_OFFSET,
         jnp.full((m_pad, _LANES - width - s), -(_LABEL_OFFSET + 1.0), jnp.float32)],
        axis=1)                        # (m_pad, 128)

    bdiag, lsel, cls = _constants(classes, s)
    ones8 = jnp.ones((8, tile_rows), jnp.float32)

    cost = pl.CostEstimate(
        flops=int(4 * m_pad * _LANES * _LANES + 16 * m_pad * _LANES),
        transcendentals=int(m_pad * _LANES),
        bytes_accessed=int(4 * m_pad * _LANES + 2 * 4 * 8 * _LANES),
    )

    grid_spec = pltpu.PrefetchScalarGridSpec(
        num_scalar_prefetch=0,
        grid=grid,
        in_specs=[
            pl.BlockSpec((tile_rows, _LANES), lambda i: (i, 0)),   # packed sample tile
            pl.BlockSpec((8, tile_rows), lambda i: (0, 0)),        # ones LHS (resident)
            pl.BlockSpec((_LANES, _LANES), lambda i: (0, 0)),      # block-diag ones
            pl.BlockSpec((_LANES, _LANES), lambda i: (0, 0)),      # label selector
            pl.BlockSpec((1, _LANES), lambda i: (0, 0)),           # per-lane class ids
        ],
        out_specs=[
            pl.BlockSpec((8, _LANES), lambda i: (0, 0)),           # tp partial (accum)
            pl.BlockSpec((8, _LANES), lambda i: (0, 0)),           # sum_p partial (accum)
        ],
    )

    tp_part, sp_part = pl.pallas_call(
        _f1_loss_kernel,
        out_shape=(jax.ShapeDtypeStruct((8, _LANES), jnp.float32),
                   jax.ShapeDtypeStruct((8, _LANES), jnp.float32)),
        grid_spec=grid_spec,
        compiler_params=pltpu.CompilerParams(
            dimension_semantics=("arbitrary",),    # sequential reduction axis
            vmem_limit_bytes=32 * 1024 * 1024,     # ~9 MiB used at cap; v7x-safe
        ),
        cost_estimate=cost,
    )(packed, ones8, jnp.asarray(bdiag), jnp.asarray(lsel), jnp.asarray(cls))
    # TODO(synk): on v7x, add a leading CORE_PARALLEL grid axis of size 2 writing
    # per-core (8,128) partials and combine them here to use both TensorCores.

    # ---- O(C) epilogue in plain JAX (per perf review) ----
    tp = jnp.sum(tp_part[0, :width].reshape(s, classes), axis=0)
    sum_p = jnp.sum(sp_part[0, :width].reshape(s, classes), axis=0)
    # Every padded sample slot has all-equal (zero) logits, so it contributed
    # ~1/classes to each class of sum_p; remove that contribution analytically.
    sum_p = sum_p - jnp.float32(n_fake) / jnp.float32(classes)
    # Per-class label histogram = column sum of the one-hot.  Compare+reduce
    # fuses in XLA (no scatter, no (N, C) materialization).
    counts = jnp.sum(
        (y_true.astype(jnp.int32)[:, None]
         == jnp.arange(classes, dtype=jnp.int32)[None, :]).astype(jnp.float32),
        axis=0)

    fp = sum_p - tp                    # sum_n (1 - onehot) * p
    fn = counts - tp                   # sum_n onehot * (1 - p)
    precision = tp / (tp + fp + epsilon)
    recall = tp / (tp + fn + epsilon)
    f1 = 2.0 * precision * recall / (precision + recall + epsilon)
    f1 = jnp.clip(f1, epsilon, 1.0 - epsilon)
    return 1.0 - jnp.mean(f1)


def _f1_loss_ref(y_pred, y_true, classes=30, epsilon=1e-7):
    """Pure-JAX reference mirroring the PyTorch module."""
    oh = jax.nn.one_hot(y_true, classes, dtype=jnp.float32)
    p = jax.nn.softmax(y_pred.astype(jnp.float32), axis=1)
    tp = jnp.sum(oh * p, axis=0)
    fp = jnp.sum((1.0 - oh) * p, axis=0)
    fn = jnp.sum(oh * (1.0 - p), axis=0)
    precision = tp / (tp + fp + epsilon)
    recall = tp / (tp + fn + epsilon)
    f1 = 2.0 * (precision * recall) / (precision + recall + epsilon)
    f1 = jnp.clip(f1, epsilon, 1.0 - epsilon)
    return 1.0 - jnp.mean(f1)


if __name__ == "__main__":
    classes = 30
    key = jax.random.PRNGKey(0)
    k1, k2, k3, k4, k5, k6 = jax.random.split(key, 6)

    # Small case: single tile, batch divisible by the 4-sample packing.
    batch = 64
    y_pred = jax.random.normal(k1, (batch, classes), dtype=jnp.float32)
    y_true = jax.random.randint(k2, (batch,), 0, classes, dtype=jnp.int32)
    loss = jax.block_until_ready(f1_loss(y_pred, y_true, classes=classes))
    ref = jax.block_until_ready(_f1_loss_ref(y_pred, y_true, classes=classes))
    assert jnp.allclose(loss, ref, atol=1e-5, rtol=1e-5), (loss, ref)

    # Tiny ragged case: heavy sample padding inside a single tile.
    batch2 = 7
    y_pred2 = jax.random.normal(k3, (batch2, classes), dtype=jnp.float32)
    y_true2 = jax.random.randint(k4, (batch2,), 0, classes, dtype=jnp.int32)
    loss2 = jax.block_until_ready(f1_loss(y_pred2, y_true2, classes=classes))
    ref2 = jax.block_until_ready(_f1_loss_ref(y_pred2, y_true2, classes=classes))
    assert jnp.allclose(loss2, ref2, atol=1e-5, rtol=1e-5), (loss2, ref2)

    # Larger ragged case with a small tile cap: exercises multi-tile
    # accumulation plus the padded-tail correction.
    batch3 = 10247
    y_pred3 = jax.random.normal(k5, (batch3, classes), dtype=jnp.float32)
    y_true3 = jax.random.randint(k6, (batch3,), 0, classes, dtype=jnp.int32)
    loss3 = jax.block_until_ready(
        f1_loss(y_pred3, y_true3, classes=classes, tile_rows_cap=256))
    ref3 = jax.block_until_ready(_f1_loss_ref(y_pred3, y_true3, classes=classes))
    assert jnp.allclose(loss3, ref3, atol=1e-4, rtol=1e-4), (loss3, ref3)

    print("KERNEL_OK")
</pallas_src>

<mosaic_0001>
module attributes {stable_mosaic.version = 11 : i64} {
  func.func @_f1_loss_kernel(%arg0: i32, %arg1: memref<16x128xf32, #tpu.memory_space<vmem>>, %arg2: memref<8x16xf32, #tpu.memory_space<vmem>>, %arg3: memref<128x128xf32, #tpu.memory_space<vmem>>, %arg4: memref<128x128xf32, #tpu.memory_space<vmem>>, %arg5: memref<1x128xf32, #tpu.memory_space<vmem>>, %arg6: memref<8x128xf32, #tpu.memory_space<vmem>>, %arg7: memref<8x128xf32, #tpu.memory_space<vmem>>) attributes {dimension_semantics = [#tpu.dimension_semantics<arbitrary>], iteration_bounds = array<i64: 1>, scalar_prefetch = 0 : i64, scratch_operands = 0 : i64, tpu.core_type = #tpu.core_type<tc>, window_params = [{transform_indices = @transform_0, window_bounds = array<i64: 16, 128>}, {pipeline_mode = #tpu.pipeline_mode<synchronous>, transform_indices = @transform_1, window_bounds = array<i64: 8, 16>}, {pipeline_mode = #tpu.pipeline_mode<synchronous>, transform_indices = @transform_2, window_bounds = array<i64: 128, 128>}, {pipeline_mode = #tpu.pipeline_mode<synchronous>, transform_indices = @transform_3, window_bounds = array<i64: 128, 128>}, {pipeline_mode = #tpu.pipeline_mode<synchronous>, transform_indices = @transform_4, window_bounds = array<i64: 1, 128>}, {pipeline_mode = #tpu.pipeline_mode<synchronous>, transform_indices = @transform_5, window_bounds = array<i64: 8, 128>}, {pipeline_mode = #tpu.pipeline_mode<synchronous>, transform_indices = @transform_6, window_bounds = array<i64: 8, 128>}]} {
    %c0_i32 = arith.constant 0 : i32
    %0 = arith.cmpi eq, %arg0, %c0_i32 : i32
    %1 = arith.extui %0 : i1 to i32
    %c0_i32_0 = arith.constant 0 : i32
    %2 = arith.cmpi ne, %1, %c0_i32_0 : i32
    scf.if %2 {
      %cst_23 = arith.constant 0.000000e+00 : f32
      %28 = vector.broadcast %cst_23 : f32 to vector<8x128xf32>
      %c0_24 = arith.constant 0 : index
      %c0_25 = arith.constant 0 : index
      %29 = vector.load %arg6[%c0_24, %c0_25] : memref<8x128xf32, #tpu.memory_space<vmem>>, vector<8x128xf32>
      tpu.vector_store %arg6[%c0_24, %c0_25], %28 {strides = array<i32>} : memref<8x128xf32, #tpu.memory_space<vmem>>, vector<8x128xf32>,
      %cst_26 = arith.constant 0.000000e+00 : f32
      %30 = vector.broadcast %cst_26 : f32 to vector<8x128xf32>
      %c0_27 = arith.constant 0 : index
      %c0_28 = arith.constant 0 : index
      %31 = vector.load %arg7[%c0_27, %c0_28] : memref<8x128xf32, #tpu.memory_space<vmem>>, vector<8x128xf32>
      tpu.vector_store %arg7[%c0_27, %c0_28], %30 {strides = array<i32>} : memref<8x128xf32, #tpu.memory_space<vmem>>, vector<8x128xf32>,
    } else {
    }
    %c0 = arith.constant 0 : index
    %c0_1 = arith.constant 0 : index
    %3 = vector.load %arg1[%c0, %c0_1] : memref<16x128xf32, #tpu.memory_space<vmem>>, vector<16x128xf32>
    %cst = arith.constant dense<0xFF800000> : vector<16xf32>
    %4 = vector.multi_reduction <maximumf>, %3, %cst [1] : vector<16x128xf32> to vector<16xf32>
    %5 = vector.shape_cast %4 : vector<16xf32> to vector<16x1xf32>
    %6 = vector.broadcast %5 : vector<16x1xf32> to vector<16x128xf32>
    %7 = arith.subf %3, %6 : vector<16x128xf32>
    %8 = math.exp %7 : vector<16x128xf32>
    %c0_2 = arith.constant 0 : index
    %c0_3 = arith.constant 0 : index
    %9 = vector.load %arg3[%c0_2, %c0_3] : memref<128x128xf32, #tpu.memory_space<vmem>>, vector<128x128xf32>
    %cst_4 = arith.constant dense<0.000000e+00> : vector<16x128xf32>
    %10 = tpu.matmul %8, %9, %cst_4 {dimension_numbers = #tpu.dot_dimension_numbers<[1], [0], [0], [1], [0, 0, 1, 1], [], []>, precision = #tpu.contract_precision<fp32>} : vector<16x128xf32>, vector<128x128xf32>, vector<16x128xf32> -> vector<16x128xf32>
    %11 = arith.divf %8, %10 : vector<16x128xf32>
    %c0_5 = arith.constant 0 : index
    %c0_6 = arith.constant 0 : index
    %12 = vector.load %arg4[%c0_5, %c0_6] : memref<128x128xf32, #tpu.memory_space<vmem>>, vector<128x128xf32>
    %cst_7 = arith.constant dense<0.000000e+00> : vector<16x128xf32>
    %13 = tpu.matmul %3, %12, %cst_7 {dimension_numbers = #tpu.dot_dimension_numbers<[1], [0], [0], [1], [0, 0, 1, 1], [], []>} : vector<16x128xf32>, vector<128x128xf32>, vector<16x128xf32> -> vector<16x128xf32>
    %c0_8 = arith.constant 0 : index
    %c0_9 = arith.constant 0 : index
    %14 = vector.load %arg5[%c0_8, %c0_9] : memref<1x128xf32, #tpu.memory_space<vmem>>, vector<1x128xf32>
    %15 = vector.broadcast %14 : vector<1x128xf32> to vector<16x128xf32>
    %16 = arith.cmpf oeq, %13, %15 : vector<16x128xf32>
    %cst_10 = arith.constant 0.000000e+00 : f32
    %17 = vector.broadcast %cst_10 : f32 to vector<16x128xf32>
    %18 = arith.select %16, %11, %17 : vector<16x128xi1>, vector<16x128xf32>
    %c0_11 = arith.constant 0 : index
    %c0_12 = arith.constant 0 : index
    %19 = vector.load %arg2[%c0_11, %c0_12] : memref<8x16xf32, #tpu.memory_space<vmem>>, vector<8x16xf32>
    %c0_13 = arith.constant 0 : index
    %c0_14 = arith.constant 0 : index
    %20 = vector.load %arg6[%c0_13, %c0_14] : memref<8x128xf32, #tpu.memory_space<vmem>>, vector<8x128xf32>
    %cst_15 = arith.constant dense<0.000000e+00> : vector<8x128xf32>
    %21 = tpu.matmul %19, %18, %cst_15 {dimension_numbers = #tpu.dot_dimension_numbers<[1], [0], [0], [1], [0, 0, 1, 1], [], []>, precision = #tpu.contract_precision<fp32>} : vector<8x16xf32>, vector<16x128xf32>, vector<8x128xf32> -> vector<8x128xf32>
    %22 = arith.addf %20, %21 : vector<8x128xf32>
    %c0_16 = arith.constant 0 : index
    %c0_17 = arith.constant 0 : index
    %23 = vector.load %arg6[%c0_16, %c0_17] : memref<8x128xf32, #tpu.memory_space<vmem>>, vector<8x128xf32>
    tpu.vector_store %arg6[%c0_16, %c0_17], %22 {strides = array<i32>} : memref<8x128xf32, #tpu.memory_space<vmem>>, vector<8x128xf32>,
    %c0_18 = arith.constant 0 : index
    %c0_19 = arith.constant 0 : index
    %24 = vector.load %arg7[%c0_18, %c0_19] : memref<8x128xf32, #tpu.memory_space<vmem>>, vector<8x128xf32>
    %cst_20 = arith.constant dense<0.000000e+00> : vector<8x128xf32>
    %25 = tpu.matmul %19, %11, %cst_20 {dimension_numbers = #tpu.dot_dimension_numbers<[1], [0], [0], [1], [0, 0, 1, 1], [], []>, precision = #tpu.contract_precision<fp32>} : vector<8x16xf32>, vector<16x128xf32>, vector<8x128xf32> -> vector<8x128xf32>
    %26 = arith.addf %24, %25 : vector<8x128xf32>
    %c0_21 = arith.constant 0 : index
    %c0_22 = arith.constant 0 : index
    %27 = vector.load %arg7[%c0_21, %c0_22] : memref<8x128xf32, #tpu.memory_space<vmem>>, vector<8x128xf32>
    tpu.vector_store %arg7[%c0_21, %c0_22], %26 {strides = array<i32>} : memref<8x128xf32, #tpu.memory_space<vmem>>, vector<8x128xf32>,
    return
  }
  func.func @transform_0(%arg0: i32) -> (i32, i32) {
    %c0_i32 = arith.constant 0 : i32
    %c0_i32_0 = arith.constant 0 : i32
    return %arg0, %c0_i32 : i32, i32
  }
  func.func @transform_1(%arg0: i32) -> (i32, i32) {
    %c0_i32 = arith.constant 0 : i32
    %c0_i32_0 = arith.constant 0 : i32
    %c0_i32_1 = arith.constant 0 : i32
    return %c0_i32, %c0_i32_0 : i32, i32
  }
  func.func @transform_2(%arg0: i32) -> (i32, i32) {
    %c0_i32 = arith.constant 0 : i32
    %c0_i32_0 = arith.constant 0 : i32
    %c0_i32_1 = arith.constant 0 : i32
    return %c0_i32, %c0_i32_0 : i32, i32
  }
  func.func @transform_3(%arg0: i32) -> (i32, i32) {
    %c0_i32 = arith.constant 0 : i32
    %c0_i32_0 = arith.constant 0 : i32
    %c0_i32_1 = arith.constant 0 : i32
    return %c0_i32, %c0_i32_0 : i32, i32
  }
  func.func @transform_4(%arg0: i32) -> (i32, i32) {
    %c0_i32 = arith.constant 0 : i32
    %c0_i32_0 = arith.constant 0 : i32
    %c0_i32_1 = arith.constant 0 : i32
    return %c0_i32, %c0_i32_0 : i32, i32
  }
  func.func @transform_5(%arg0: i32) -> (i32, i32) {
    %c0_i32 = arith.constant 0 : i32
    %c0_i32_0 = arith.constant 0 : i32
    %c0_i32_1 = arith.constant 0 : i32
    return %c0_i32, %c0_i32_0 : i32, i32
  }
  func.func @transform_6(%arg0: i32) -> (i32, i32) {
    %c0_i32 = arith.constant 0 : i32
    %c0_i32_0 = arith.constant 0 : i32
    %c0_i32_1 = arith.constant 0 : i32
    return %c0_i32, %c0_i32_0 : i32, i32
  }
}

</mosaic_0001>

<llo_original>
// kernel: squeeze.2
$region0: #{squeeze.2}
  %s0 = inlined_call_operand.vmem [shape: f32[120], index: 0, kind: input, shape index: {}]
  %s1 = inlined_call_operand.vmem [shape: f32[4,30], index: 1, kind: output, shape index: {}]
  $region1: #{squeeze.2} parent=0
    #allocation0 [shape = 'u8[4096]{0}', space=vmem, size = 0x1000, scoped, tag = 'scoped mem for output reshape']
    #allocation1 [shape = 'u8[4096]{0}', space=vmem, size = 0x1000, scoped, tag = 'scoped mem for input reshape']
    %s3 = sshll.u32 1, 1
    %s4 = ssub.s32 %s3, 1
    %v5 = vld [vmem:[%s0] sm:%s4]
    %6 = vst [vmem:[#allocation1] sm:%s4] %v5
    %v7 = vld [vmem:[#allocation1] sm:$0x1]
    %vm8 = vcmask 244736
    %9 = vst.msk [vmem:[#allocation0] sm:$0x1] %vm8, %v7
    %v10 = vld [vmem:[#allocation1] sm:$0x1]
    %11 = vrot.lane.b32.xlu0 %v10, 98
    %v12 = vpop.permute.xlu0 %11
    %vm13 = vcmask 244736
    %s14 = scalar_lea.vmem [#allocation0], 1
    %15 = vst.msk [vmem:[%s14] sm:$0x1] %vm13, %v12
    %v16 = vld [vmem:[#allocation1] sm:$0x1]
    %17 = vrot.lane.b32.xlu0 %v16, 68
    %v18 = vpop.permute.xlu0 %17
    %vm19 = vcmask 244736
    %s20 = scalar_lea.vmem [#allocation0], 2
    %21 = vst.msk [vmem:[%s20] sm:$0x1] %vm19, %v18
    %v22 = vld [vmem:[#allocation1] sm:$0x1]
    %23 = vrot.lane.b32.xlu0 %v22, 38
    %v24 = vpop.permute.xlu0 %23
    %vm25 = vcmask 244736
    %s26 = scalar_lea.vmem [#allocation0], 3
    %27 = vst.msk [vmem:[%s26] sm:$0x1] %vm25, %v24
    %s29 = sshll.u32 1, 4
    %s30 = ssub.s32 %s29, 1
    %v32 = vld [vmem:[#allocation0] sm:%s30]
    %s33 = sshll.u32 1, 4
    %s34 = ssub.s32 %s33, 1
    %35 = vst [vmem:[%s1] sm:%s34] %v32

// kernel: f1_loss.1
$region0: #{f1_loss.1}
  #allocation0 [shape = 'u32[]', space=smem, size = 0x4, offset = 0x4, fixed_abs, tag = 'smem constant byte address 0x4 - core index']
  #allocation1 [shape = 'u32[144,128]{1,0:T(1,128)}', space=vmem, size = 0x12000, scoped, tag = 'internal scratch']
  %s0 = inlined_call_operand.vmem [shape: f32[16,128], index: 0, kind: input, shape index: {}]
  %s1 = inlined_call_operand.vmem [shape: f32[8,16], index: 1, kind: input, shape index: {}]
  %s2 = inlined_call_operand.vmem [shape: f32[128,128], index: 2, kind: input, shape index: {}]
  %s3 = inlined_call_operand.vmem [shape: f32[128,128], index: 3, kind: input, shape index: {}]
  %s4 = inlined_call_operand.vmem [shape: f32[1,128], index: 4, kind: input, shape index: {}]
  %s5 = inlined_call_operand.vmem [shape: f32[8,128], index: 5, kind: output, shape index: {0}]
  %s6 = inlined_call_operand.vmem [shape: f32[8,128], index: 6, kind: output, shape index: {1}]
  %7 = xla_tuple %s5, %s6
  %s8 = sld [smem:[#allocation0]]
  $region42: #{f1_loss.1} parent=0
    _
  %s10 = ssub.s32 1, %s8
  %s11 = scalar_select 0, %s10, %s8
  // Predicated region
  $region2: #{f1_loss.1} parent=0 // pred_check
    _
  $region3: #{f1_loss.1} parent=0 // pred_check_branch
    %13 = sbr.rel (0) target = $region5
  $region4: #{f1_loss.1} parent=0 // pred_region
    _
  $region5: #{f1_loss.1} parent=0 // pred_fallthru
    _
  // Predicated region
  $region6: #{f1_loss.1} parent=0 // pred_check
    _
  $region7: #{f1_loss.1} parent=0 // pred_check_branch
    %15 = sbr.rel (0) target = $region9
  $region8: #{f1_loss.1} parent=0 // pred_region
    _
  $region9: #{f1_loss.1} parent=0 // pred_fallthru
    _
  // Predicated region
  $region10: #{f1_loss.1} parent=0 // pred_check
    _
  $region11: #{f1_loss.1} parent=0 // pred_check_branch
    %17 = sbr.rel (0) target = $region13
  $region12: #{f1_loss.1} parent=0 // pred_region
    _
  $region13: #{f1_loss.1} parent=0 // pred_fallthru
    _
  // Predicated region
  $region14: #{f1_loss.1} parent=0 // pred_check
    _
  $region15: #{f1_loss.1} parent=0 // pred_check_branch
    %19 = sbr.rel (0) target = $region17
  $region16: #{f1_loss.1} parent=0 // pred_region
    _
  $region17: #{f1_loss.1} parent=0 // pred_fallthru
    _
  // Predicated region
  $region18: #{f1_loss.1} parent=0 // pred_check
    _
  $region19: #{f1_loss.1} parent=0 // pred_check_branch
    %21 = sbr.rel (0) target = $region21
  $region20: #{f1_loss.1} parent=0 // pred_region
    _
  $region21: #{f1_loss.1} parent=0 // pred_fallthru
    _
  %p22 = scmp.eq.s32.totalorder 0, 0
  // Predicated region
  $region22: #{f1_loss.1} parent=0 // pred_check
    %p23 = pneg %p22
  $region23: #{f1_loss.1} parent=0 // pred_check_branch
    %25 = sbr.rel (%p23) target = $region25
  $region24: #{f1_loss.1} parent=0 // pred_region
    %26 = vst [vmem:[%s5] sm:$0xff] 0.0
    %27 = vst [vmem:[%s6] sm:$0xff] 0.0
  $region25: #{f1_loss.1} parent=0 // pred_fallthru
    _
  %v28 = vld [vmem:[%s0] sm:$0xff]
  %v29 = vld [vmem:[%s0 + $0x8] sm:$0xff]
  %30 = vmax.xlane.f32.xlu0 %v28
  %v31 = vpop.xlane.xlu0 %30
  %32 = vmax.xlane.f32.xlu0 %v29
  %v33 = vpop.xlane.xlu0 %32
  %v34 = vsub.f32 %v28, %v31
  %v35 = vsub.f32 %v29, %v33
  %v36 = vmul.f32 %v34, 1.442695
  %v37 = vpow.pop %v36
  %v38 = vmul.f32 %v35, 1.442695
  %v39 = vpow.pop %v38
  %v40 = vld [vmem:[%s2] sm:$0xff]
  %v41 = vld [vmem:[%s2 + $0x8] sm:$0xff]
  %v42 = vld [vmem:[%s2 + $0x10] sm:$0xff]
  %v43 = vld [vmem:[%s2 + $0x18] sm:$0xff]
  %v44 = vld [vmem:[%s2 + $0x20] sm:$0xff]
  %v45 = vld [vmem:[%s2 + $0x28] sm:$0xff]
  %v46 = vld [vmem:[%s2 + $0x30] sm:$0xff]
  %v47 = vld [vmem:[%s2 + $0x38] sm:$0xff]
  %v48 = vld [vmem:[%s2 + $0x40] sm:$0xff]
  %v49 = vld [vmem:[%s2 + $0x48] sm:$0xff]
  %v50 = vld [vmem:[%s2 + $0x50] sm:$0xff]
  %v51 = vld [vmem:[%s2 + $0x58] sm:$0xff]
  %v52 = vld [vmem:[%s2 + $0x60] sm:$0xff]
  %v53 = vld [vmem:[%s2 + $0x68] sm:$0xff]
  %v54 = vld [vmem:[%s2 + $0x70] sm:$0xff]
  %v55 = vld [vmem:[%s2 + $0x78] sm:$0xff]
  %56 = vmatprep.subr.mxu0 0.0
  %v57 = vand.u32 %v55, 4294901760
  %58 = vmatpush1.msra.mxu0 %v57
  %59 = vmatprep.subr.mxu0 0.0
  %v60 = vand.u32 %v54, 4294901760
  %61 = vmatpush1.msra.mxu0 %v60
  %62 = vmatprep.subr.mxu0 0.0
  %v63 = vand.u32 %v53, 4294901760
  %64 = vmatpush1.msra.mxu0 %v63
  %65 = vmatprep.subr.mxu0 0.0
  %v66 = vand.u32 %v52, 4294901760
  %67 = vmatpush1.msra.mxu0 %v66
  %68 = vmatprep.subr.mxu0 0.0
  %v69 = vand.u32 %v51, 4294901760
  %70 = vmatpush1.msra.mxu0 %v69
  %71 = vmatprep.subr.mxu0 0.0
  %v72 = vand.u32 %v50, 4294901760
  %73 = vmatpush1.msra.mxu0 %v72
  %74 = vmatprep.subr.mxu0 0.0
  %v75 = vand.u32 %v49, 4294901760
  %76 = vmatpush1.msra.mxu0 %v75
  %77 = vmatprep.subr.mxu0 0.0
  %v78 = vand.u32 %v48, 4294901760
  %79 = vmatpush1.msra.mxu0 %v78
  %80 = vmatprep.subr.mxu0 0.0
  %v81 = vand.u32 %v47, 4294901760
  %82 = vmatpush1.msra.mxu0 %v81
  %83 = vmatprep.subr.mxu0 0.0
  %v84 = vand.u32 %v46, 4294901760
  %85 = vmatpush1.msra.mxu0 %v84
  %86 = vmatprep.subr.mxu0 0.0
  %v87 = vand.u32 %v45, 4294901760
  %88 = vmatpush1.msra.mxu0 %v87
  %89 = vmatprep.subr.mxu0 0.0
  %v90 = vand.u32 %v44, 4294901760
  %91 = vmatpush1.msra.mxu0 %v90
  %92 = vmatprep.subr.mxu0 0.0
  %v93 = vand.u32 %v43, 4294901760
  %94 = vmatpush1.msra.mxu0 %v93
  %95 = vmatprep.subr.mxu0 0.0
  %v96 = vand.u32 %v42, 4294901760
  %97 = vmatpush1.msra.mxu0 %v96
  %98 = vmatprep.subr.mxu0 0.0
  %v99 = vand.u32 %v41, 4294901760
  %100 = vmatpush1.msra.mxu0 %v99
  %101 = vmatprep.subr.mxu0 0.0
  %v102 = vand.u32 %v40, 4294901760
  %103 = vmatpush1.msra.mxu0 %v102
  %104 = vmatprep.subr.mxu0 0.0
  %105 = vmatpush2.msra.mxu0 0.0
  %106 = vmatprep.subr.mxu0 0.0
  %107 = vmatpush2.msra.mxu0 0.0
  %108 = vmatprep.subr.mxu0 0.0
  %109 = vmatpush2.msra.mxu0 0.0
  %110 = vmatprep.subr.mxu0 0.0
  %111 = vmatpush2.msra.mxu0 0.0
  %112 = vmatprep.subr.mxu0 0.0
  %113 = vmatpush2.msra.mxu0 0.0
  %114 = vmatprep.subr.mxu0 0.0
  %115 = vmatpush2.msra.mxu0 0.0
  %116 = vmatprep.subr.mxu0 0.0
  %117 = vmatpush2.msra.mxu0 0.0
  %118 = vmatprep.subr.mxu0 0.0
  %119 = vmatpush2.msra.mxu0 0.0
  %120 = vmatprep.subr.mxu0 0.0
  %121 = vmatpush2.msra.mxu0 0.0
  %122 = vmatprep.subr.mxu0 0.0
  %123 = vmatpush2.msra.mxu0 0.0
  %124 = vmatprep.subr.mxu0 0.0
  %125 = vmatpush2.msra.mxu0 0.0
  %126 = vmatprep.subr.mxu0 0.0
  %127 = vmatpush2.msra.mxu0 0.0
  %128 = vmatprep.subr.mxu0 0.0
  %129 = vmatpush2.msra.mxu0 0.0
  %130 = vmatprep.subr.mxu0 0.0
  %131 = vmatpush2.msra.mxu0 0.0
  %132 = vmatprep.subr.mxu0 0.0
  %133 = vmatpush2.msra.mxu0 0.0
  %134 = vmatprep.subr.mxu0 0.0
  %135 = vmatpush2.msra.mxu0 0.0
  %136 = vmatprep.mubr.f32.mxu0 0.0
  %v137 = vand.u32 %v37, 4294901760
  %v138 = vsub.f32 %v37, %v137
  %v139 = vand.u32 %v138, 4294901760
  %v140 = vsub.f32 %v138, %v139
  %v141 = vand.u32 %v140, 4294901760
  %142 = vmatmul.mubr.f32.gmra.mxu0 %v141
  %v143 = vpop.f32.mrf.mxu0
  %v144 = vadd.f32 0.0, %v143
  %v145 = vpop.f32.mrf.mxu0
  %146 = vmatprep.mubr.f32.mxu0 0.0
  %v147 = vand.u32 %v39, 4294901760
  %v148 = vsub.f32 %v39, %v147
  %v149 = vand.u32 %v148, 4294901760
  %v150 = vsub.f32 %v148, %v149
  %v151 = vand.u32 %v150, 4294901760
  %152 = vmatmul.mubr.f32.gmra.mxu0 %v151
  %v153 = vpop.f32.mrf.mxu0
  %v154 = vadd.f32 0.0, %v153
  %v155 = vpop.f32.mrf.mxu0
  %156 = vdwg.mxu0
  %157 = vmatprep.subr.mxu0 0.0
  %v158 = vand.u32 %v55, 4294901760
  %v159 = vsub.f32 %v55, %v158
  %v160 = vand.u32 %v159, 4294901760
  %v161 = vsub.f32 %v159, %v160
  %v162 = vand.u32 %v161, 4294901760
  %163 = vmatpush1.msra.mxu0 %v162
  %164 = vmatprep.subr.mxu0 0.0
  %v165 = vand.u32 %v54, 4294901760
  %v166 = vsub.f32 %v54, %v165
  %v167 = vand.u32 %v166, 4294901760
  %v168 = vsub.f32 %v166, %v167
  %v169 = vand.u32 %v168, 4294901760
  %170 = vmatpush1.msra.mxu0 %v169
  %171 = vmatprep.subr.mxu0 0.0
  %v172 = vand.u32 %v53, 4294901760
  %v173 = vsub.f32 %v53, %v172
  %v174 = vand.u32 %v173, 4294901760
  %v175 = vsub.f32 %v173, %v174
  %v176 = vand.u32 %v175, 4294901760
  %177 = vmatpush1.msra.mxu0 %v176
  %178 = vmatprep.subr.mxu0 0.0
  %v179 = vand.u32 %v52, 4294901760
  %v180 = vsub.f32 %v52, %v179
  %v181 = vand.u32 %v180, 4294901760
  %v182 = vsub.f32 %v180, %v181
  %v183 = vand.u32 %v182, 4294901760
  %184 = vmatpush1.msra.mxu0 %v183
  %185 = vmatprep.subr.mxu0 0.0
  %v186 = vand.u32 %v51, 4294901760
  %v187 = vsub.f32 %v51, %v186
  %v188 = vand.u32 %v187, 4294901760
  %v189 = vsub.f32 %v187, %v188
  %v190 = vand.u32 %v189, 4294901760
  %191 = vmatpush1.msra.mxu0 %v190
  %192 = vmatprep.subr.mxu0 0.0
  %v193 = vand.u32 %v50, 4294901760
  %v194 = vsub.f32 %v50, %v193
  %v195 = vand.u32 %v194, 4294901760
  %v196 = vsub.f32 %v194, %v195
  %v197 = vand.u32 %v196, 4294901760
  %198 = vmatpush1.msra.mxu0 %v197
  %199 = vmatprep.subr.mxu0 0.0
  %v200 = vand.u32 %v49, 4294901760
  %v201 = vsub.f32 %v49, %v200
  %v202 = vand.u32 %v201, 4294901760
  %v203 = vsub.f32 %v201, %v202
  %v204 = vand.u32 %v203, 4294901760
  %205 = vmatpush1.msra.mxu0 %v204
  %206 = vmatprep.subr.mxu0 0.0
  %v207 = vand.u32 %v48, 4294901760
  %v208 = vsub.f32 %v48, %v207
  %v209 = vand.u32 %v208, 4294901760
  %v210 = vsub.f32 %v208, %v209
  %v211 = vand.u32 %v210, 4294901760
  %212 = vmatpush1.msra.mxu0 %v211
  %213 = vmatprep.subr.mxu0 0.0
  %v214 = vand.u32 %v47, 4294901760
  %v215 = vsub.f32 %v47, %v214
  %v216 = vand.u32 %v215, 4294901760
  %v217 = vsub.f32 %v215, %v216
  %v218 = vand.u32 %v217, 4294901760
  %219 = vmatpush1.msra.mxu0 %v218
  %220 = vmatprep.subr.mxu0 0.0
  %v221 = vand.u32 %v46, 4294901760
  %v222 = vsub.f32 %v46, %v221
  %v223 = vand.u32 %v222, 4294901760
  %v224 = vsub.f32 %v222, %v223
  %v225 = vand.u32 %v224, 4294901760
  %226 = vmatpush1.msra.mxu0 %v225
  %227 = vmatprep.subr.mxu0 0.0
  %v228 = vand.u32 %v45, 4294901760
  %v229 = vsub.f32 %v45, %v228
  %v230 = vand.u32 %v229, 4294901760
  %v231 = vsub.f32 %v229, %v230
  %v232 = vand.u32 %v231, 4294901760
  %233 = vmatpush1.msra.mxu0 %v232
  %234 = vmatprep.subr.mxu0 0.0
  %v235 = vand.u32 %v44, 4294901760
  %v236 = vsub.f32 %v44, %v235
  %v237 = vand.u32 %v236, 4294901760
  %v238 = vsub.f32 %v236, %v237
  %v239 = vand.u32 %v238, 4294901760
  %240 = vmatpush1.msra.mxu0 %v239
  %241 = vmatprep.subr.mxu0 0.0
  %v242 = vand.u32 %v43, 4294901760
  %v243 = vsub.f32 %v43, %v242
  %v244 = vand.u32 %v243, 4294901760
  %v245 = vsub.f32 %v243, %v244
  %v246 = vand.u32 %v245, 4294901760
  %247 = vmatpush1.msra.mxu0 %v246
  %248 = vmatprep.subr.mxu0 0.0
  %v249 = vand.u32 %v42, 4294901760
  %v250 = vsub.f32 %v42, %v249
  %v251 = vand.u32 %v250, 4294901760
  %v252 = vsub.f32 %v250, %v251
  %v253 = vand.u32 %v252, 4294901760
  %254 = vmatpush1.msra.mxu0 %v253
  %255 = vmatprep.subr.mxu0 0.0
  %v256 = vand.u32 %v41, 4294901760
  %v257 = vsub.f32 %v41, %v256
  %v258 = vand.u32 %v257, 4294901760
  %v259 = vsub.f32 %v257, %v258
  %v260 = vand.u32 %v259, 4294901760
  %261 = vmatpush1.msra.mxu0 %v260
  %262 = vmatprep.subr.mxu0 0.0
  %v263 = vand.u32 %v40, 4294901760
  %v264 = vsub.f32 %v40, %v263
  %v265 = vand.u32 %v264, 4294901760
  %v266 = vsub.f32 %v264, %v265
  %v267 = vand.u32 %v266, 4294901760
  %268 = vmatpush1.msra.mxu0 %v267
  %269 = vmatprep.subr.mxu0 0.0
  %270 = vmatpush2.msra.mxu0 0.0
  %271 = vmatprep.subr.mxu0 0.0
  %272 = vmatpush2.msra.mxu0 0.0
  %273 = vmatprep.subr.mxu0 0.0
  %274 = vmatpush2.msra.mxu0 0.0
  %275 = vmatprep.subr.mxu0 0.0
  %276 = vmatpush2.msra.mxu0 0.0
  %277 = vmatprep.subr.mxu0 0.0
  %278 = vmatpush2.msra.mxu0 0.0
  %279 = vmatprep.subr.mxu0 0.0
  %280 = vmatpush2.msra.mxu0 0.0
  %281 = vmatprep.subr.mxu0 0.0
  %282 = vmatpush2.msra.mxu0 0.0
  %283 = vmatprep.subr.mxu0 0.0
  %284 = vmatpush2.msra.mxu0 0.0
  %285 = vmatprep.subr.mxu0 0.0
  %286 = vmatpush2.msra.mxu0 0.0
  %287 = vmatprep.subr.mxu0 0.0
  %288 = vmatpush2.msra.mxu0 0.0
  %289 = vmatprep.subr.mxu0 0.0
  %290 = vmatpush2.msra.mxu0 0.0
  %291 = vmatprep.subr.mxu0 0.0
  %292 = vmatpush2.msra.mxu0 0.0
  %293 = vmatprep.subr.mxu0 0.0
  %294 = vmatpush2.msra.mxu0 0.0
  %295 = vmatprep.subr.mxu0 0.0
  %296 = vmatpush2.msra.mxu0 0.0
  %297 = vmatprep.subr.mxu0 0.0
  %298 = vmatpush2.msra.mxu0 0.0
  %299 = vmatprep.subr.mxu0 0.0
  %300 = vmatpush2.msra.mxu0 0.0
  %301 = vmatprep.mubr.f32.mxu0 0.0
  %v302 = vand.u32 %v37, 4294901760
  %303 = vmatmul.mubr.f32.gmra.mxu0 %v302
  %v304 = vpop.f32.mrf.mxu0
  %v305 = vadd.f32 %v144, %v304
  %v306 = vpop.f32.mrf.mxu0
  %307 = vmatprep.mubr.f32.mxu0 0.0
  %v308 = vand.u32 %v39, 4294901760
  %309 = vmatmul.mubr.f32.gmra.mxu0 %v308
  %v310 = vpop.f32.mrf.mxu0
  %v311 = vadd.f32 %v154, %v310
  %v312 = vpop.f32.mrf.mxu0
  %313 = vdwg.mxu0
  %314 = vmatprep.subr.mxu0 0.0
  %v315 = vand.u32 %v55, 4294901760
  %v316 = vsub.f32 %v55, %v315
  %317 = vmatpush1.msra.mxu0 %v316
  %318 = vmatprep.subr.mxu0 0.0
  %v319 = vand.u32 %v54, 4294901760
  %v320 = vsub.f32 %v54, %v319
  %321 = vmatpush1.msra.mxu0 %v320
  %322 = vmatprep.subr.mxu0 0.0
  %v323 = vand.u32 %v53, 4294901760
  %v324 = vsub.f32 %v53, %v323
  %325 = vmatpush1.msra.mxu0 %v324
  %326 = vmatprep.subr.mxu0 0.0
  %v327 = vand.u32 %v52, 4294901760
  %v328 = vsub.f32 %v52, %v327
  %329 = vmatpush1.msra.mxu0 %v328
  %330 = vmatprep.subr.mxu0 0.0
  %v331 = vand.u32 %v51, 4294901760
  %v332 = vsub.f32 %v51, %v331
  %333 = vmatpush1.msra.mxu0 %v332
  %334 = vmatprep.subr.mxu0 0.0
  %v335 = vand.u32 %v50, 4294901760
  %v336 = vsub.f32 %v50, %v335
  %337 = vmatpush1.msra.mxu0 %v336
  %338 = vmatprep.subr.mxu0 0.0
  %v339 = vand.u32 %v49, 4294901760
  %v340 = vsub.f32 %v49, %v339
  %341 = vmatpush1.msra.mxu0 %v340
  %342 = vmatprep.subr.mxu0 0.0
  %v343 = vand.u32 %v48, 4294901760
  %v344 = vsub.f32 %v48, %v343
  %345 = vmatpush1.msra.mxu0 %v344
  %346 = vmatprep.subr.mxu0 0.0
  %v347 = vand.u32 %v47, 4294901760
  %v348 = vsub.f32 %v47, %v347
  %349 = vmatpush1.msra.mxu0 %v348
  %350 = vmatprep.subr.mxu0 0.0
  %v351 = vand.u32 %v46, 4294901760
  %v352 = vsub.f32 %v46, %v351
  %353 = vmatpush1.msra.mxu0 %v352
  %354 = vmatprep.subr.mxu0 0.0
  %v355 = vand.u32 %v45, 4294901760
  %v356 = vsub.f32 %v45, %v355
  %357 = vmatpush1.msra.mxu0 %v356
  %358 = vmatprep.subr.mxu0 0.0
  %v359 = vand.u32 %v44, 4294901760
  %v360 = vsub.f32 %v44, %v359
  %361 = vmatpush1.msra.mxu0 %v360
  %362 = vmatprep.subr.mxu0 0.0
  %v363 = vand.u32 %v43, 4294901760
  %v364 = vsub.f32 %v43, %v363
  %365 = vmatpush1.msra.mxu0 %v364
  %366 = vmatprep.subr.mxu0 0.0
  %v367 = vand.u32 %v42, 4294901760
  %v368 = vsub.f32 %v42, %v367
  %369 = vmatpush1.msra.mxu0 %v368
  %370 = vmatprep.subr.mxu0 0.0
  %v371 = vand.u32 %v41, 4294901760
  %v372 = vsub.f32 %v41, %v371
  %373 = vmatpush1.msra.mxu0 %v372
  %374 = vmatprep.subr.mxu0 0.0
  %v375 = vand.u32 %v40, 4294901760
  %v376 = vsub.f32 %v40, %v375
  %377 = vmatpush1.msra.mxu0 %v376
  %378 = vmatprep.subr.mxu0 0.0
  %379 = vmatpush2.msra.mxu0 0.0
  %380 = vmatprep.subr.mxu0 0.0
  %381 = vmatpush2.msra.mxu0 0.0
  %382 = vmatprep.subr.mxu0 0.0
  %383 = vmatpush2.msra.mxu0 0.0
  %384 = vmatprep.subr.mxu0 0.0
  %385 = vmatpush2.msra.mxu0 0.0
  %386 = vmatprep.subr.mxu0 0.0
  %387 = vmatpush2.msra.mxu0 0.0
  %388 = vmatprep.subr.mxu0 0.0
  %389 = vmatpush2.msra.mxu0 0.0
  %390 = vmatprep.subr.mxu0 0.0
  %391 = vmatpush2.msra.mxu0 0.0
  %392 = vmatprep.subr.mxu0 0.0
  %393 = vmatpush2.msra.mxu0 0.0
  %394 = vmatprep.subr.mxu0 0.0
  %395 = vmatpush2.msra.mxu0 0.0
  %396 = vmatprep.subr.mxu0 0.0
  %397 = vmatpush2.msra.mxu0 0.0
  %398 = vmatprep.subr.mxu0 0.0
  %399 = vmatpush2.msra.mxu0 0.0
  %400 = vmatprep.subr.mxu0 0.0
  %401 = vmatpush2.msra.mxu0 0.0
  %402 = vmatprep.subr.mxu0 0.0
  %403 = vmatpush2.msra.mxu0 0.0
  %404 = vmatprep.subr.mxu0 0.0
  %405 = vmatpush2.msra.mxu0 0.0
  %406 = vmatprep.subr.mxu0 0.0
  %407 = vmatpush2.msra.mxu0 0.0
  %408 = vmatprep.subr.mxu0 0.0
  %409 = vmatpush2.msra.mxu0 0.0
  %410 = vmatprep.mubr.f32.mxu0 0.0
  %v411 = vand.u32 %v37, 4294901760
  %v412 = vsub.f32 %v37, %v411
  %413 = vmatmul.mubr.f32.gmra.mxu0 %v412
  %v414 = vpop.f32.mrf.mxu0
  %v415 = vadd.f32 %v305, %v414
  %v416 = vpop.f32.mrf.mxu0
  %417 = vmatprep.mubr.f32.mxu0 0.0
  %v418 = vand.u32 %v39, 4294901760
  %v419 = vsub.f32 %v39, %v418
  %420 = vmatmul.mubr.f32.gmra.mxu0 %v419
  %v421 = vpop.f32.mrf.mxu0
  %v422 = vadd.f32 %v311, %v421
  %v423 = vpop.f32.mrf.mxu0
  %424 = vdwg.mxu0
  %425 = vmatprep.subr.mxu0 0.0
  %v426 = vand.u32 %v55, 4294901760
  %427 = vmatpush1.msra.mxu0 %v426
  %428 = vmatprep.subr.mxu0 0.0
  %v429 = vand.u32 %v54, 4294901760
  %430 = vmatpush1.msra.mxu0 %v429
  %431 = vmatprep.subr.mxu0 0.0
  %v432 = vand.u32 %v53, 4294901760
  %433 = vmatpush1.msra.mxu0 %v432
  %434 = vmatprep.subr.mxu0 0.0
  %v435 = vand.u32 %v52, 4294901760
  %436 = vmatpush1.msra.mxu0 %v435
  %437 = vmatprep.subr.mxu0 0.0
  %v438 = vand.u32 %v51, 4294901760
  %439 = vmatpush1.msra.mxu0 %v438
  %440 = vmatprep.subr.mxu0 0.0
  %v441 = vand.u32 %v50, 4294901760
  %442 = vmatpush1.msra.mxu0 %v441
  %443 = vmatprep.subr.mxu0 0.0
  %v444 = vand.u32 %v49, 4294901760
  %445 = vmatpush1.msra.mxu0 %v444
  %446 = vmatprep.subr.mxu0 0.0
  %v447 = vand.u32 %v48, 4294901760
  %448 = vmatpush1.msra.mxu0 %v447
  %449 = vmatprep.subr.mxu0 0.0
  %v450 = vand.u32 %v47, 4294901760
  %451 = vmatpush1.msra.mxu0 %v450
  %452 = vmatprep.subr.mxu0 0.0
  %v453 = vand.u32 %v46, 4294901760
  %454 = vmatpush1.msra.mxu0 %v453
  %455 = vmatprep.subr.mxu0 0.0
  %v456 = vand.u32 %v45, 4294901760
  %457 = vmatpush1.msra.mxu0 %v456
  %458 = vmatprep.subr.mxu0 0.0
  %v459 = vand.u32 %v44, 4294901760
  %460 = vmatpush1.msra.mxu0 %v459
  %461 = vmatprep.subr.mxu0 0.0
  %v462 = vand.u32 %v43, 4294901760
  %463 = vmatpush1.msra.mxu0 %v462
  %464 = vmatprep.subr.mxu0 0.0
  %v465 = vand.u32 %v42, 4294901760
  %466 = vmatpush1.msra.mxu0 %v465
  %467 = vmatprep.subr.mxu0 0.0
  %v468 = vand.u32 %v41, 4294901760
  %469 = vmatpush1.msra.mxu0 %v468
  %470 = vmatprep.subr.mxu0 0.0
  %v471 = vand.u32 %v40, 4294901760
  %472 = vmatpush1.msra.mxu0 %v471
  %473 = vmatprep.subr.mxu0 0.0
  %474 = vmatpush2.msra.mxu0 0.0
  %475 = vmatprep.subr.mxu0 0.0
  %476 = vmatpush2.msra.mxu0 0.0
  %477 = vmatprep.subr.mxu0 0.0
  %478 = vmatpush2.msra.mxu0 0.0
  %479 = vmatprep.subr.mxu0 0.0
  %480 = vmatpush2.msra.mxu0 0.0
  %481 = vmatprep.subr.mxu0 0.0
  %482 = vmatpush2.msra.mxu0 0.0
  %483 = vmatprep.subr.mxu0 0.0
  %484 = vmatpush2.msra.mxu0 0.0
  %485 = vmatprep.subr.mxu0 0.0
  %486 = vmatpush2.msra.mxu0 0.0
  %487 = vmatprep.subr.mxu0 0.0
  %488 = vmatpush2.msra.mxu0 0.0
  %489 = vmatprep.subr.mxu0 0.0
  %490 = vmatpush2.msra.mxu0 0.0
  %491 = vmatprep.subr.mxu0 0.0
  %492 = vmatpush2.msra.mxu0 0.0
  %493 = vmatprep.subr.mxu0 0.0
  %494 = vmatpush2.msra.mxu0 0.0
  %495 = vmatprep.subr.mxu0 0.0
  %496 = vmatpush2.msra.mxu0 0.0
  %497 = vmatprep.subr.mxu0 0.0
  %498 = vmatpush2.msra.mxu0 0.0
  %499 = vmatprep.subr.mxu0 0.0
  %500 = vmatpush2.msra.mxu0 0.0
  %501 = vmatprep.subr.mxu0 0.0
  %502 = vmatpush2.msra.mxu0 0.0
  %503 = vmatprep.subr.mxu0 0.0
  %504 = vmatpush2.msra.mxu0 0.0
  %505 = vmatprep.mubr.f32.mxu0 0.0
  %v506 = vand.u32 %v37, 4294901760
  %v507 = vsub.f32 %v37, %v506
  %v508 = vand.u32 %v507, 4294901760
  %509 = vmatmul.mubr.f32.gmra.mxu0 %v508
  %v510 = vpop.f32.mrf.mxu0
  %v511 = vadd.f32 %v415, %v510
  %v512 = vpop.f32.mrf.mxu0
  %513 = vmatprep.mubr.f32.mxu0 0.0
  %v514 = vand.u32 %v39, 4294901760
  %v515 = vsub.f32 %v39, %v514
  %v516 = vand.u32 %v515, 4294901760
  %517 = vmatmul.mubr.f32.gmra.mxu0 %v516
  %v518 = vpop.f32.mrf.mxu0
  %v519 = vadd.f32 %v422, %v518
  %v520 = vpop.f32.mrf.mxu0
  %521 = vdwg.mxu0
  %522 = vmatprep.subr.mxu0 0.0
  %v523 = vand.u32 %v55, 4294901760
  %v524 = vsub.f32 %v55, %v523
  %v525 = vand.u32 %v524, 4294901760
  %526 = vmatpush1.msra.mxu0 %v525
  %527 = vmatprep.subr.mxu0 0.0
  %v528 = vand.u32 %v54, 4294901760
  %v529 = vsub.f32 %v54, %v528
  %v530 = vand.u32 %v529, 4294901760
  %531 = vmatpush1.msra.mxu0 %v530
  %532 = vmatprep.subr.mxu0 0.0
  %v533 = vand.u32 %v53, 4294901760
  %v534 = vsub.f32 %v53, %v533
  %v535 = vand.u32 %v534, 4294901760
  %536 = vmatpush1.msra.mxu0 %v535
  %537 = vmatprep.subr.mxu0 0.0
  %v538 = vand.u32 %v52, 4294901760
  %v539 = vsub.f32 %v52, %v538
  %v540 = vand.u32 %v539, 4294901760
  %541 = vmatpush1.msra.mxu0 %v540
  %542 = vmatprep.subr.mxu0 0.0
  %v543 = vand.u32 %v51, 4294901760
  %v544 = vsub.f32 %v51, %v543
  %v545 = vand.u32 %v544, 4294901760
  %546 = vmatpush1.msra.mxu0 %v545
  %547 = vmatprep.subr.mxu0 0.0
  %v548 = vand.u32 %v50, 4294901760
  %v549 = vsub.f32 %v50, %v548
  %v550 = vand.u32 %v549, 4294901760
  %551 = vmatpush1.msra.mxu0 %v550
  %552 = vmatprep.subr.mxu0 0.0
  %v553 = vand.u32 %v49, 4294901760
  %v554 = vsub.f32 %v49, %v553
  %v555 = vand.u32 %v554, 4294901760
  %556 = vmatpush1.msra.mxu0 %v555
  %557 = vmatprep.subr.mxu0 0.0
  %v558 = vand.u32 %v48, 4294901760
  %v559 = vsub.f32 %v48, %v558
  %v560 = vand.u32 %v559, 4294901760
  %561 = vmatpush1.msra.mxu0 %v560
  %562 = vmatprep.subr.mxu0 0.0
  %v563 = vand.u32 %v47, 4294901760
  %v564 = vsub.f32 %v47, %v563
  %v565 = vand.u32 %v564, 4294901760
  %566 = vmatpush1.msra.mxu0 %v565
  %567 = vmatprep.subr.mxu0 0.0
  %v568 = vand.u32 %v46, 4294901760
  %v569 = vsub.f32 %v46, %v568
  %v570 = vand.u32 %v569, 4294901760
  %571 = vmatpush1.msra.mxu0 %v570
  %572 = vmatprep.subr.mxu0 0.0
  %v573 = vand.u32 %v45, 4294901760
  %v574 = vsub.f32 %v45, %v573
  %v575 = vand.u32 %v574, 4294901760
  %576 = vmatpush1.msra.mxu0 %v575
  %577 = vmatprep.subr.mxu0 0.0
  %v578 = vand.u32 %v44, 4294901760
  %v579 = vsub.f32 %v44, %v578
  %v580 = vand.u32 %v579, 4294901760
  %581 = vmatpush1.msra.mxu0 %v580
  %582 = vmatprep.subr.mxu0 0.0
  %v583 = vand.u32 %v43, 4294901760
  %v584 = vsub.f32 %v43, %v583
  %v585 = vand.u32 %v584, 4294901760
  %586 = vmatpush1.msra.mxu0 %v585
  %587 = vmatprep.subr.mxu0 0.0
  %v588 = vand.u32 %v42, 4294901760
  %v589 = vsub.f32 %v42, %v588
  %v590 = vand.u32 %v589, 4294901760
  %591 = vmatpush1.msra.mxu0 %v590
  %592 = vmatprep.subr.mxu0 0.0
  %v593 = vand.u32 %v41, 4294901760
  %v594 = vsub.f32 %v41, %v593
  %v595 = vand.u32 %v594, 4294901760
  %596 = vmatpush1.msra.mxu0 %v595
  %597 = vmatprep.subr.mxu0 0.0
  %v598 = vand.u32 %v40, 4294901760
  %v599 = vsub.f32 %v40, %v598
  %v600 = vand.u32 %v599, 4294901760
  %601 = vmatpush1.msra.mxu0 %v600
  %602 = vmatprep.subr.mxu0 0.0
  %603 = vmatpush2.msra.mxu0 0.0
  %604 = vmatprep.subr.mxu0 0.0
  %605 = vmatpush2.msra.mxu0 0.0
  %606 = vmatprep.subr.mxu0 0.0
  %607 = vmatpush2.msra.mxu0 0.0
  %608 = vmatprep.subr.mxu0 0.0
  %609 = vmatpush2.msra.mxu0 0.0
  %610 = vmatprep.subr.mxu0 0.0
  %611 = vmatpush2.msra.mxu0 0.0
  %612 = vmatprep.subr.mxu0 0.0
  %613 = vmatpush2.msra.mxu0 0.0
  %614 = vmatprep.subr.mxu0 0.0
  %615 = vmatpush2.msra.mxu0 0.0
  %616 = vmatprep.subr.mxu0 0.0
  %617 = vmatpush2.msra.mxu0 0.0
  %618 = vmatprep.subr.mxu0 0.0
  %619 = vmatpush2.msra.mxu0 0.0
  %620 = vmatprep.subr.mxu0 0.0
  %621 = vmatpush2.msra.mxu0 0.0
  %622 = vmatprep.subr.mxu0 0.0
  %623 = vmatpush2.msra.mxu0 0.0
  %624 = vmatprep.subr.mxu0 0.0
  %625 = vmatpush2.msra.mxu0 0.0
  %626 = vmatprep.subr.mxu0 0.0
  %627 = vmatpush2.msra.mxu0 0.0
  %628 = vmatprep.subr.mxu0 0.0
  %629 = vmatpush2.msra.mxu0 0.0
  %630 = vmatprep.subr.mxu0 0.0
  %631 = vmatpush2.msra.mxu0 0.0
  %632 = vmatprep.subr.mxu0 0.0
  %633 = vmatpush2.msra.mxu0 0.0
  %634 = vmatprep.mubr.f32.mxu0 0.0
  %v635 = vand.u32 %v37, 4294901760
  %636 = vmatmul.mubr.f32.gmra.mxu0 %v635
  %v637 = vpop.f32.mrf.mxu0
  %v638 = vadd.f32 %v511, %v637
  %v639 = vpop.f32.mrf.mxu0
  %640 = vmatprep.mubr.f32.mxu0 0.0
  %v641 = vand.u32 %v39, 4294901760
  %642 = vmatmul.mubr.f32.gmra.mxu0 %v641
  %v643 = vpop.f32.mrf.mxu0
  %v644 = vadd.f32 %v519, %v643
  %v645 = vpop.f32.mrf.mxu0
  %646 = vdwg.mxu0
  %647 = vmatprep.subr.mxu0 0.0
  %v648 = vand.u32 %v55, 4294901760
  %649 = vmatpush1.msra.mxu0 %v648
  %650 = vmatprep.subr.mxu0 0.0
  %v651 = vand.u32 %v54, 4294901760
  %652 = vmatpush1.msra.mxu0 %v651
  %653 = vmatprep.subr.mxu0 0.0
  %v654 = vand.u32 %v53, 4294901760
  %655 = vmatpush1.msra.mxu0 %v654
  %656 = vmatprep.subr.mxu0 0.0
  %v657 = vand.u32 %v52, 4294901760
  %658 = vmatpush1.msra.mxu0 %v657
  %659 = vmatprep.subr.mxu0 0.0
  %v660 = vand.u32 %v51, 4294901760
  %661 = vmatpush1.msra.mxu0 %v660
  %662 = vmatprep.subr.mxu0 0.0
  %v663 = vand.u32 %v50, 4294901760
  %664 = vmatpush1.msra.mxu0 %v663
  %665 = vmatprep.subr.mxu0 0.0
  %v666 = vand.u32 %v49, 4294901760
  %667 = vmatpush1.msra.mxu0 %v666
  %668 = vmatprep.subr.mxu0 0.0
  %v669 = vand.u32 %v48, 4294901760
  %670 = vmatpush1.msra.mxu0 %v669
  %671 = vmatprep.subr.mxu0 0.0
  %v672 = vand.u32 %v47, 4294901760
  %673 = vmatpush1.msra.mxu0 %v672
  %674 = vmatprep.subr.mxu0 0.0
  %v675 = vand.u32 %v46, 4294901760
  %676 = vmatpush1.msra.mxu0 %v675
  %677 = vmatprep.subr.mxu0 0.0
  %v678 = vand.u32 %v45, 4294901760
  %679 = vmatpush1.msra.mxu0 %v678
  %680 = vmatprep.subr.mxu0 0.0
  %v681 = vand.u32 %v44, 4294901760
  %682 = vmatpush1.msra.mxu0 %v681
  %683 = vmatprep.subr.mxu0 0.0
  %v684 = vand.u32 %v43, 4294901760
  %685 = vmatpush1.msra.mxu0 %v684
  %686 = vmatprep.subr.mxu0 0.0
  %v687 = vand.u32 %v42, 4294901760
  %688 = vmatpush1.msra.mxu0 %v687
  %689 = vmatprep.subr.mxu0 0.0
  %v690 = vand.u32 %v41, 4294901760
  %691 = vmatpush1.msra.mxu0 %v690
  %692 = vmatprep.subr.mxu0 0.0
  %v693 = vand.u32 %v40, 4294901760
  %694 = vmatpush1.msra.mxu0 %v693
  %695 = vmatprep.subr.mxu0 0.0
  %696 = vmatpush2.msra.mxu0 0.0
  %697 = vmatprep.subr.mxu0 0.0
  %698 = vmatpush2.msra.mxu0 0.0
  %699 = vmatprep.subr.mxu0 0.0
  %700 = vmatpush2.msra.mxu0 0.0
  %701 = vmatprep.subr.mxu0 0.0
  %702 = vmatpush2.msra.mxu0 0.0
  %703 = vmatprep.subr.mxu0 0.0
  %704 = vmatpush2.msra.mxu0 0.0
  %705 = vmatprep.subr.mxu0 0.0
  %706 = vmatpush2.msra.mxu0 0.0
  %707 = vmatprep.subr.mxu0 0.0
  %708 = vmatpush2.msra.mxu0 0.0
  %709 = vmatprep.subr.mxu0 0.0
  %710 = vmatpush2.msra.mxu0 0.0
  %711 = vmatprep.subr.mxu0 0.0
  %712 = vmatpush2.msra.mxu0 0.0
  %713 = vmatprep.subr.mxu0 0.0
  %714 = vmatpush2.msra.mxu0 0.0
  %715 = vmatprep.subr.mxu0 0.0
  %716 = vmatpush2.msra.mxu0 0.0
  %717 = vmatprep.subr.mxu0 0.0
  %718 = vmatpush2.msra.mxu0 0.0
  %719 = vmatprep.subr.mxu0 0.0
  %720 = vmatpush2.msra.mxu0 0.0
  %721 = vmatprep.subr.mxu0 0.0
  %722 = vmatpush2.msra.mxu0 0.0
  %723 = vmatprep.subr.mxu0 0.0
  %724 = vmatpush2.msra.mxu0 0.0
  %725 = vmatprep.subr.mxu0 0.0
  %726 = vmatpush2.msra.mxu0 0.0
  %727 = vmatprep.mubr.f32.mxu0 0.0
  %v728 = vand.u32 %v37, 4294901760
  %729 = vmatmul.mubr.f32.gmra.mxu0 %v728
  %v730 = vpop.f32.mrf.mxu0
  %v731 = vadd.f32 %v638, %v730
  %v732 = vpop.f32.mrf.mxu0
  %733 = vmatprep.mubr.f32.mxu0 0.0
  %v734 = vand.u32 %v39, 4294901760
  %735 = vmatmul.mubr.f32.gmra.mxu0 %v734
  %v736 = vpop.f32.mrf.mxu0
  %v737 = vadd.f32 %v644, %v736
  %v738 = vpop.f32.mrf.mxu0
  %739 = vdwg.mxu0
  %v740 = vrcp.pop %v731
  %v741 = vmul.f32 %v37, %v740
  %v742 = vrcp.pop %v737
  %v743 = vmul.f32 %v39, %v742
  %v744 = vld [vmem:[%s3] sm:$0xff]
  %v745 = vld [vmem:[%s3 + $0x8] sm:$0xff]
  %v746 = vld [vmem:[%s3 + $0x10] sm:$0xff]
  %v747 = vld [vmem:[%s3 + $0x18] sm:$0xff]
  %v748 = vld [vmem:[%s3 + $0x20] sm:$0xff]
  %v749 = vld [vmem:[%s3 + $0x28] sm:$0xff]
  %v750 = vld [vmem:[%s3 + $0x30] sm:$0xff]
  %v751 = vld [vmem:[%s3 + $0x38] sm:$0xff]
  %v752 = vld [vmem:[%s3 + $0x40] sm:$0xff]
  %v753 = vld [vmem:[%s3 + $0x48] sm:$0xff]
  %v754 = vld [vmem:[%s3 + $0x50] sm:$0xff]
  %v755 = vld [vmem:[%s3 + $0x58] sm:$0xff]
  %v756 = vld [vmem:[%s3 + $0x60] sm:$0xff]
  %v757 = vld [vmem:[%s3 + $0x68] sm:$0xff]
  %v758 = vld [vmem:[%s3 + $0x70] sm:$0xff]
  %v759 = vld [vmem:[%s3 + $0x78] sm:$0xff]
  %760 = vmatprep.subr.mxu0 0.0
  %761 = vmatpush1.msra.mxu0 %v759
  %762 = vmatprep.subr.mxu0 0.0
  %763 = vmatpush1.msra.mxu0 %v758
  %764 = vmatprep.subr.mxu0 0.0
  %765 = vmatpush1.msra.mxu0 %v757
  %766 = vmatprep.subr.mxu0 0.0
  %767 = vmatpush1.msra.mxu0 %v756
  %768 = vmatprep.subr.mxu0 0.0
  %769 = vmatpush1.msra.mxu0 %v755
  %770 = vmatprep.subr.mxu0 0.0
  %771 = vmatpush1.msra.mxu0 %v754
  %772 = vmatprep.subr.mxu0 0.0
  %773 = vmatpush1.msra.mxu0 %v753
  %774 = vmatprep.subr.mxu0 0.0
  %775 = vmatpush1.msra.mxu0 %v752
  %776 = vmatprep.subr.mxu0 0.0
  %777 = vmatpush1.msra.mxu0 %v751
  %778 = vmatprep.subr.mxu0 0.0
  %779 = vmatpush1.msra.mxu0 %v750
  %780 = vmatprep.subr.mxu0 0.0
  %781 = vmatpush1.msra.mxu0 %v749
  %782 = vmatprep.subr.mxu0 0.0
  %783 = vmatpush1.msra.mxu0 %v748
  %784 = vmatprep.subr.mxu0 0.0
  %785 = vmatpush1.msra.mxu0 %v747
  %786 = vmatprep.subr.mxu0 0.0
  %787 = vmatpush1.msra.mxu0 %v746
  %788 = vmatprep.subr.mxu0 0.0
  %789 = vmatpush1.msra.mxu0 %v745
  %790 = vmatprep.subr.mxu0 0.0
  %791 = vmatpush1.msra.mxu0 %v744
  %792 = vmatprep.subr.mxu0 0.0
  %793 = vmatpush2.msra.mxu0 0.0
  %794 = vmatprep.subr.mxu0 0.0
  %795 = vmatpush2.msra.mxu0 0.0
  %796 = vmatprep.subr.mxu0 0.0
  %797 = vmatpush2.msra.mxu0 0.0
  %798 = vmatprep.subr.mxu0 0.0
  %799 = vmatpush2.msra.mxu0 0.0
  %800 = vmatprep.subr.mxu0 0.0
  %801 = vmatpush2.msra.mxu0 0.0
  %802 = vmatprep.subr.mxu0 0.0
  %803 = vmatpush2.msra.mxu0 0.0
  %804 = vmatprep.subr.mxu0 0.0
  %805 = vmatpush2.msra.mxu0 0.0
  %806 = vmatprep.subr.mxu0 0.0
  %807 = vmatpush2.msra.mxu0 0.0
  %808 = vmatprep.subr.mxu0 0.0
  %809 = vmatpush2.msra.mxu0 0.0
  %810 = vmatprep.subr.mxu0 0.0
  %811 = vmatpush2.msra.mxu0 0.0
  %812 = vmatprep.subr.mxu0 0.0
  %813 = vmatpush2.msra.mxu0 0.0
  %814 = vmatprep.subr.mxu0 0.0
  %815 = vmatpush2.msra.mxu0 0.0
  %816 = vmatprep.subr.mxu0 0.0
  %817 = vmatpush2.msra.mxu0 0.0
  %818 = vmatprep.subr.mxu0 0.0
  %819 = vmatpush2.msra.mxu0 0.0
  %820 = vmatprep.subr.mxu0 0.0
  %821 = vmatpush2.msra.mxu0 0.0
  %822 = vmatprep.subr.mxu0 0.0
  %823 = vmatpush2.msra.mxu0 0.0
  %824 = vmatprep.mubr.f32.mxu0 0.0
  %825 = vmatmul.mubr.f32.gmra.mxu0 %v28
  %v826 = vpop.f32.mrf.mxu0
  %v827 = vadd.f32 0.0, %v826
  %v828 = vpop.f32.mrf.mxu0
  %829 = vmatprep.mubr.f32.mxu0 0.0
  %830 = vmatmul.mubr.f32.gmra.mxu0 %v29
  %v831 = vpop.f32.mrf.mxu0
  %v832 = vadd.f32 0.0, %v831
  %v833 = vpop.f32.mrf.mxu0
  %834 = vdwg.mxu0
  %v835 = vld [vmem:[%s4] sm:$0x1]
  %v837 = vlaneseq
  %v838 = vshrl.u32 %v837, 7
  %v839 = vsub.s32 0, %v838
  %v840 = vrot.slane %v835, %v839
  %vm842 = vcmp.eq.f32.partialorder %v827, %v840
  %vm843 = vcmp.eq.f32.partialorder %v832, %v840
  %v844 = vsel %vm842, %v741, 0.0
  %v845 = vsel %vm843, %v743, 0.0
  %v846 = vld [vmem:[%s1] sm:$0xff]
  %v847 = vld [vmem:[%s5] sm:$0xff]
  %vm848 = vcmask 130048
  %v850 = vsel %vm848, %v846, 0
  %852 = vmatprep.subr.mxu0 0.0
  %853 = vmatpush1.msra.mxu0 0.0
  %854 = vmatprep.subr.mxu0 0.0
  %855 = vmatpush1.msra.mxu0 0.0
  %856 = vmatprep.subr.mxu0 0.0
  %857 = vmatpush1.msra.mxu0 0.0
  %858 = vmatprep.subr.mxu0 0.0
  %859 = vmatpush1.msra.mxu0 0.0
  %860 = vmatprep.subr.mxu0 0.0
  %861 = vmatpush1.msra.mxu0 0.0
  %862 = vmatprep.subr.mxu0 0.0
  %863 = vmatpush1.msra.mxu0 0.0
  %864 = vmatprep.subr.mxu0 0.0
  %865 = vmatpush1.msra.mxu0 0.0
  %866 = vmatprep.subr.mxu0 0.0
  %867 = vmatpush1.msra.mxu0 0.0
  %868 = vmatprep.subr.mxu0 0.0
  %869 = vmatpush1.msra.mxu0 0.0
  %870 = vmatprep.subr.mxu0 0.0
  %871 = vmatpush1.msra.mxu0 0.0
  %872 = vmatprep.subr.mxu0 0.0
  %873 = vmatpush1.msra.mxu0 0.0
  %874 = vmatprep.subr.mxu0 0.0
  %875 = vmatpush1.msra.mxu0 0.0
  %876 = vmatprep.subr.mxu0 0.0
  %877 = vmatpush1.msra.mxu0 0.0
  %878 = vmatprep.subr.mxu0 0.0
  %879 = vmatpush1.msra.mxu0 0.0
  %880 = vmatprep.subr.mxu0 0.0
  %v881 = vand.u32 %v845, 4294901760
  %882 = vmatpush1.msra.mxu0 %v881
  %883 = vmatprep.subr.mxu0 0.0
  %v884 = vand.u32 %v844, 4294901760
  %885 = vmatpush1.msra.mxu0 %v884
  %886 = vmatprep.subr.mxu0 0.0
  %887 = vmatpush2.msra.mxu0 0.0
  %888 = vmatprep.subr.mxu0 0.0
  %889 = vmatpush2.msra.mxu0 0.0
  %890 = vmatprep.subr.mxu0 0.0
  %891 = vmatpush2.msra.mxu0 0.0
  %892 = vmatprep.subr.mxu0 0.0
  %893 = vmatpush2.msra.mxu0 0.0
  %894 = vmatprep.subr.mxu0 0.0
  %895 = vmatpush2.msra.mxu0 0.0
  %896 = vmatprep.subr.mxu0 0.0
  %897 = vmatpush2.msra.mxu0 0.0
  %898 = vmatprep.subr.mxu0 0.0
  %899 = vmatpush2.msra.mxu0 0.0
  %900 = vmatprep.subr.mxu0 0.0
  %901 = vmatpush2.msra.mxu0 0.0
  %902 = vmatprep.subr.mxu0 0.0
  %903 = vmatpush2.msra.mxu0 0.0
  %904 = vmatprep.subr.mxu0 0.0
  %905 = vmatpush2.msra.mxu0 0.0
  %906 = vmatprep.subr.mxu0 0.0
  %907 = vmatpush2.msra.mxu0 0.0
  %908 = vmatprep.subr.mxu0 0.0
  %909 = vmatpush2.msra.mxu0 0.0
  %910 = vmatprep.subr.mxu0 0.0
  %911 = vmatpush2.msra.mxu0 0.0
  %912 = vmatprep.subr.mxu0 0.0
  %913 = vmatpush2.msra.mxu0 0.0
  %914 = vmatprep.subr.mxu0 0.0
  %915 = vmatpush2.msra.mxu0 0.0
  %916 = vmatprep.subr.mxu0 0.0
  %917 = vmatpush2.msra.mxu0 0.0
  %918 = vmatprep.mubr.f32.mxu0 0.0
  %v919 = vand.u32 %v850, 4294901760
  %v920 = vsub.f32 %v850, %v919
  %v921 = vand.u32 %v920, 4294901760
  %v922 = vsub.f32 %v920, %v921
  %v923 = vand.u32 %v922, 4294901760
  %924 = vmatmul.mubr.f32.gmra.mxu0 %v923
  %v925 = vpop.f32.mrf.mxu0
  %v926 = vadd.f32 0.0, %v925
  %v927 = vpop.f32.mrf.mxu0
  %928 = vdwg.mxu0
  %929 = vmatprep.subr.mxu0 0.0
  %930 = vmatpush1.msra.mxu0 0.0
  %931 = vmatprep.subr.mxu0 0.0
  %932 = vmatpush1.msra.mxu0 0.0
  %933 = vmatprep.subr.mxu0 0.0
  %934 = vmatpush1.msra.mxu0 0.0
  %935 = vmatprep.subr.mxu0 0.0
  %936 = vmatpush1.msra.mxu0 0.0
  %937 = vmatprep.subr.mxu0 0.0
  %938 = vmatpush1.msra.mxu0 0.0
  %939 = vmatprep.subr.mxu0 0.0
  %940 = vmatpush1.msra.mxu0 0.0
  %941 = vmatprep.subr.mxu0 0.0
  %942 = vmatpush1.msra.mxu0 0.0
  %943 = vmatprep.subr.mxu0 0.0
  %944 = vmatpush1.msra.mxu0 0.0
  %945 = vmatprep.subr.mxu0 0.0
  %946 = vmatpush1.msra.mxu0 0.0
  %947 = vmatprep.subr.mxu0 0.0
  %948 = vmatpush1.msra.mxu0 0.0
  %949 = vmatprep.subr.mxu0 0.0
  %950 = vmatpush1.msra.mxu0 0.0
  %951 = vmatprep.subr.mxu0 0.0
  %952 = vmatpush1.msra.mxu0 0.0
  %953 = vmatprep.subr.mxu0 0.0
  %954 = vmatpush1.msra.mxu0 0.0
  %955 = vmatprep.subr.mxu0 0.0
  %956 = vmatpush1.msra.mxu0 0.0
  %957 = vmatprep.subr.mxu0 0.0
  %v958 = vand.u32 %v845, 4294901760
  %v959 = vsub.f32 %v845, %v958
  %v960 = vand.u32 %v959, 4294901760
  %v961 = vsub.f32 %v959, %v960
  %v962 = vand.u32 %v961, 4294901760
  %963 = vmatpush1.msra.mxu0 %v962
  %964 = vmatprep.subr.mxu0 0.0
  %v965 = vand.u32 %v844, 4294901760
  %v966 = vsub.f32 %v844, %v965
  %v967 = vand.u32 %v966, 4294901760
  %v968 = vsub.f32 %v966, %v967
  %v969 = vand.u32 %v968, 4294901760
  %970 = vmatpush1.msra.mxu0 %v969
  %971 = vmatprep.subr.mxu0 0.0
  %972 = vmatpush2.msra.mxu0 0.0
  %973 = vmatprep.subr.mxu0 0.0
  %974 = vmatpush2.msra.mxu0 0.0
  %975 = vmatprep.subr.mxu0 0.0
  %976 = vmatpush2.msra.mxu0 0.0
  %977 = vmatprep.subr.mxu0 0.0
  %978 = vmatpush2.msra.mxu0 0.0
  %979 = vmatprep.subr.mxu0 0.0
  %980 = vmatpush2.msra.mxu0 0.0
  %981 = vmatprep.subr.mxu0 0.0
  %982 = vmatpush2.msra.mxu0 0.0
  %983 = vmatprep.subr.mxu0 0.0
  %984 = vmatpush2.msra.mxu0 0.0
  %985 = vmatprep.subr.mxu0 0.0
  %986 = vmatpush2.msra.mxu0 0.0
  %987 = vmatprep.subr.mxu0 0.0
  %988 = vmatpush2.msra.mxu0 0.0
  %989 = vmatprep.subr.mxu0 0.0
  %990 = vmatpush2.msra.mxu0 0.0
  %991 = vmatprep.subr.mxu0 0.0
  %992 = vmatpush2.msra.mxu0 0.0
  %993 = vmatprep.subr.mxu0 0.0
  %994 = vmatpush2.msra.mxu0 0.0
  %995 = vmatprep.subr.mxu0 0.0
  %996 = vmatpush2.msra.mxu0 0.0
  %997 = vmatprep.subr.mxu0 0.0
  %998 = vmatpush2.msra.mxu0 0.0
  %999 = vmatprep.subr.mxu0 0.0
  %1000 = vmatpush2.msra.mxu0 0.0
  %1001 = vmatprep.subr.mxu0 0.0
  %1002 = vmatpush2.msra.mxu0 0.0
  %1003 = vmatprep.mubr.f32.mxu0 0.0
  %v1004 = vand.u32 %v850, 4294901760
  %1005 = vmatmul.mubr.f32.gmra.mxu0 %v1004
  %v1006 = vpop.f32.mrf.mxu0
  %v1007 = vadd.f32 %v926, %v1006
  %v1008 = vpop.f32.mrf.mxu0
  %1009 = vdwg.mxu0
  %1010 = vmatprep.subr.mxu0 0.0
  %1011 = vmatpush1.msra.mxu0 0.0
  %1012 = vmatprep.subr.mxu0 0.0
  %1013 = vmatpush1.msra.mxu0 0.0
  %1014 = vmatprep.subr.mxu0 0.0
  %1015 = vmatpush1.msra.mxu0 0.0
  %1016 = vmatprep.subr.mxu0 0.0
  %1017 = vmatpush1.msra.mxu0 0.0
  %1018 = vmatprep.subr.mxu0 0.0
  %1019 = vmatpush1.msra.mxu0 0.0
  %1020 = vmatprep.subr.mxu0 0.0
  %1021 = vmatpush1.msra.mxu0 0.0
  %1022 = vmatprep.subr.mxu0 0.0
  %1023 = vmatpush1.msra.mxu0 0.0
  %1024 = vmatprep.subr.mxu0 0.0
  %1025 = vmatpush1.msra.mxu0 0.0
  %1026 = vmatprep.subr.mxu0 0.0
  %1027 = vmatpush1.msra.mxu0 0.0
  %1028 = vmatprep.subr.mxu0 0.0
  %1029 = vmatpush1.msra.mxu0 0.0
  %1030 = vmatprep.subr.mxu0 0.0
  %1031 = vmatpush1.msra.mxu0 0.0
  %1032 = vmatprep.subr.mxu0 0.0
  %1033 = vmatpush1.msra.mxu0 0.0
  %1034 = vmatprep.subr.mxu0 0.0
  %1035 = vmatpush1.msra.mxu0 0.0
  %1036 = vmatprep.subr.mxu0 0.0
  %1037 = vmatpush1.msra.mxu0 0.0
  %1038 = vmatprep.subr.mxu0 0.0
  %v1039 = vand.u32 %v845, 4294901760
  %v1040 = vsub.f32 %v845, %v1039
  %1041 = vmatpush1.msra.mxu0 %v1040
  %1042 = vmatprep.subr.mxu0 0.0
  %v1043 = vand.u32 %v844, 4294901760
  %v1044 = vsub.f32 %v844, %v1043
  %1045 = vmatpush1.msra.mxu0 %v1044
  %1046 = vmatprep.subr.mxu0 0.0
  %1047 = vmatpush2.msra.mxu0 0.0
  %1048 = vmatprep.subr.mxu0 0.0
  %1049 = vmatpush2.msra.mxu0 0.0
  %1050 = vmatprep.subr.mxu0 0.0
  %1051 = vmatpush2.msra.mxu0 0.0
  %1052 = vmatprep.subr.mxu0 0.0
  %1053 = vmatpush2.msra.mxu0 0.0
  %1054 = vmatprep.subr.mxu0 0.0
  %1055 = vmatpush2.msra.mxu0 0.0
  %1056 = vmatprep.subr.mxu0 0.0
  %1057 = vmatpush2.msra.mxu0 0.0
  %1058 = vmatprep.subr.mxu0 0.0
  %1059 = vmatpush2.msra.mxu0 0.0
  %1060 = vmatprep.subr.mxu0 0.0
  %1061 = vmatpush2.msra.mxu0 0.0
  %1062 = vmatprep.subr.mxu0 0.0
  %1063 = vmatpush2.msra.mxu0 0.0
  %1064 = vmatprep.subr.mxu0 0.0
  %1065 = vmatpush2.msra.mxu0 0.0
  %1066 = vmatprep.subr.mxu0 0.0
  %1067 = vmatpush2.msra.mxu0 0.0
  %1068 = vmatprep.subr.mxu0 0.0
  %1069 = vmatpush2.msra.mxu0 0.0
  %1070 = vmatprep.subr.mxu0 0.0
  %1071 = vmatpush2.msra.mxu0 0.0
  %1072 = vmatprep.subr.mxu0 0.0
  %1073 = vmatpush2.msra.mxu0 0.0
  %1074 = vmatprep.subr.mxu0 0.0
  %1075 = vmatpush2.msra.mxu0 0.0
  %1076 = vmatprep.subr.mxu0 0.0
  %1077 = vmatpush2.msra.mxu0 0.0
  %1078 = vmatprep.mubr.f32.mxu0 0.0
  %v1079 = vand.u32 %v850, 4294901760
  %v1080 = vsub.f32 %v850, %v1079
  %1081 = vmatmul.mubr.f32.gmra.mxu0 %v1080
  %v1082 = vpop.f32.mrf.mxu0
  %v1083 = vadd.f32 %v1007, %v1082
  %v1084 = vpop.f32.mrf.mxu0
  %1085 = vdwg.mxu0
  %1086 = vmatprep.subr.mxu0 0.0
  %1087 = vmatpush1.msra.mxu0 0.0
  %1088 = vmatprep.subr.mxu0 0.0
  %1089 = vmatpush1.msra.mxu0 0.0
  %1090 = vmatprep.subr.mxu0 0.0
  %1091 = vmatpush1.msra.mxu0 0.0
  %1092 = vmatprep.subr.mxu0 0.0
  %1093 = vmatpush1.msra.mxu0 0.0
  %1094 = vmatprep.subr.mxu0 0.0
  %1095 = vmatpush1.msra.mxu0 0.0
  %1096 = vmatprep.subr.mxu0 0.0
  %1097 = vmatpush1.msra.mxu0 0.0
  %1098 = vmatprep.subr.mxu0 0.0
  %1099 = vmatpush1.msra.mxu0 0.0
  %1100 = vmatprep.subr.mxu0 0.0
  %1101 = vmatpush1.msra.mxu0 0.0
  %1102 = vmatprep.subr.mxu0 0.0
  %1103 = vmatpush1.msra.mxu0 0.0
  %1104 = vmatprep.subr.mxu0 0.0
  %1105 = vmatpush1.msra.mxu0 0.0
  %1106 = vmatprep.subr.mxu0 0.0
  %1107 = vmatpush1.msra.mxu0 0.0
  %1108 = vmatprep.subr.mxu0 0.0
  %1109 = vmatpush1.msra.mxu0 0.0
  %1110 = vmatprep.subr.mxu0 0.0
  %1111 = vmatpush1.msra.mxu0 0.0
  %1112 = vmatprep.subr.mxu0 0.0
  %1113 = vmatpush1.msra.mxu0 0.0
  %1114 = vmatprep.subr.mxu0 0.0
  %v1115 = vand.u32 %v845, 4294901760
  %1116 = vmatpush1.msra.mxu0 %v1115
  %1117 = vmatprep.subr.mxu0 0.0
  %v1118 = vand.u32 %v844, 4294901760
  %1119 = vmatpush1.msra.mxu0 %v1118
  %1120 = vmatprep.subr.mxu0 0.0
  %1121 = vmatpush2.msra.mxu0 0.0
  %1122 = vmatprep.subr.mxu0 0.0
  %1123 = vmatpush2.msra.mxu0 0.0
  %1124 = vmatprep.subr.mxu0 0.0
  %1125 = vmatpush2.msra.mxu0 0.0
  %1126 = vmatprep.subr.mxu0 0.0
  %1127 = vmatpush2.msra.mxu0 0.0
  %1128 = vmatprep.subr.mxu0 0.0
  %1129 = vmatpush2.msra.mxu0 0.0
  %1130 = vmatprep.subr.mxu0 0.0
  %1131 = vmatpush2.msra.mxu0 0.0
  %1132 = vmatprep.subr.mxu0 0.0
  %1133 = vmatpush2.msra.mxu0 0.0
  %1134 = vmatprep.subr.mxu0 0.0
  %1135 = vmatpush2.msra.mxu0 0.0
  %1136 = vmatprep.subr.mxu0 0.0
  %1137 = vmatpush2.msra.mxu0 0.0
  %1138 = vmatprep.subr.mxu0 0.0
  %1139 = vmatpush2.msra.mxu0 0.0
  %1140 = vmatprep.subr.mxu0 0.0
  %1141 = vmatpush2.msra.mxu0 0.0
  %1142 = vmatprep.subr.mxu0 0.0
  %1143 = vmatpush2.msra.mxu0 0.0
  %1144 = vmatprep.subr.mxu0 0.0
  %1145 = vmatpush2.msra.mxu0 0.0
  %1146 = vmatprep.subr.mxu0 0.0
  %1147 = vmatpush2.msra.mxu0 0.0
  %1148 = vmatprep.subr.mxu0 0.0
  %1149 = vmatpush2.msra.mxu0 0.0
  %1150 = vmatprep.subr.mxu0 0.0
  %1151 = vmatpush2.msra.mxu0 0.0
  %1152 = vmatprep.mubr.f32.mxu0 0.0
  %v1153 = vand.u32 %v850, 4294901760
  %v1154 = vsub.f32 %v850, %v1153
  %v1155 = vand.u32 %v1154, 4294901760
  %1156 = vmatmul.mubr.f32.gmra.mxu0 %v1155
  %v1157 = vpop.f32.mrf.mxu0
  %v1158 = vadd.f32 %v1083, %v1157
  %v1159 = vpop.f32.mrf.mxu0
  %1160 = vdwg.mxu0
  %1161 = vmatprep.subr.mxu0 0.0
  %1162 = vmatpush1.msra.mxu0 0.0
  %1163 = vmatprep.subr.mxu0 0.0
  %1164 = vmatpush1.msra.mxu0 0.0
  %1165 = vmatprep.subr.mxu0 0.0
  %1166 = vmatpush1.msra.mxu0 0.0
  %1167 = vmatprep.subr.mxu0 0.0
  %1168 = vmatpush1.msra.mxu0 0.0
  %1169 = vmatprep.subr.mxu0 0.0
  %1170 = vmatpush1.msra.mxu0 0.0
  %1171 = vmatprep.subr.mxu0 0.0
  %1172 = vmatpush1.msra.mxu0 0.0
  %1173 = vmatprep.subr.mxu0 0.0
  %1174 = vmatpush1.msra.mxu0 0.0
  %1175 = vmatprep.subr.mxu0 0.0
  %1176 = vmatpush1.msra.mxu0 0.0
  %1177 = vmatprep.subr.mxu0 0.0
  %1178 = vmatpush1.msra.mxu0 0.0
  %1179 = vmatprep.subr.mxu0 0.0
  %1180 = vmatpush1.msra.mxu0 0.0
  %1181 = vmatprep.subr.mxu0 0.0
  %1182 = vmatpush1.msra.mxu0 0.0
  %1183 = vmatprep.subr.mxu0 0.0
  %1184 = vmatpush1.msra.mxu0 0.0
  %1185 = vmatprep.subr.mxu0 0.0
  %1186 = vmatpush1.msra.mxu0 0.0
  %1187 = vmatprep.subr.mxu0 0.0
  %1188 = vmatpush1.msra.mxu0 0.0
  %1189 = vmatprep.subr.mxu0 0.0
  %v1190 = vand.u32 %v845, 4294901760
  %v1191 = vsub.f32 %v845, %v1190
  %v1192 = vand.u32 %v1191, 4294901760
  %1193 = vmatpush1.msra.mxu0 %v1192
  %1194 = vmatprep.subr.mxu0 0.0
  %v1195 = vand.u32 %v844, 4294901760
  %v1196 = vsub.f32 %v844, %v1195
  %v1197 = vand.u32 %v1196, 4294901760
  %1198 = vmatpush1.msra.mxu0 %v1197
  %1199 = vmatprep.subr.mxu0 0.0
  %1200 = vmatpush2.msra.mxu0 0.0
  %1201 = vmatprep.subr.mxu0 0.0
  %1202 = vmatpush2.msra.mxu0 0.0
  %1203 = vmatprep.subr.mxu0 0.0
  %1204 = vmatpush2.msra.mxu0 0.0
  %1205 = vmatprep.subr.mxu0 0.0
  %1206 = vmatpush2.msra.mxu0 0.0
  %1207 = vmatprep.subr.mxu0 0.0
  %1208 = vmatpush2.msra.mxu0 0.0
  %1209 = vmatprep.subr.mxu0 0.0
  %1210 = vmatpush2.msra.mxu0 0.0
  %1211 = vmatprep.subr.mxu0 0.0
  %1212 = vmatpush2.msra.mxu0 0.0
  %1213 = vmatprep.subr.mxu0 0.0
  %1214 = vmatpush2.msra.mxu0 0.0
  %1215 = vmatprep.subr.mxu0 0.0
  %1216 = vmatpush2.msra.mxu0 0.0
  %1217 = vmatprep.subr.mxu0 0.0
  %1218 = vmatpush2.msra.mxu0 0.0
  %1219 = vmatprep.subr.mxu0 0.0
  %1220 = vmatpush2.msra.mxu0 0.0
  %1221 = vmatprep.subr.mxu0 0.0
  %1222 = vmatpush2.msra.mxu0 0.0
  %1223 = vmatprep.subr.mxu0 0.0
  %1224 = vmatpush2.msra.mxu0 0.0
  %1225 = vmatprep.subr.mxu0 0.0
  %1226 = vmatpush2.msra.mxu0 0.0
  %1227 = vmatprep.subr.mxu0 0.0
  %1228 = vmatpush2.msra.mxu0 0.0
  %1229 = vmatprep.subr.mxu0 0.0
  %1230 = vmatpush2.msra.mxu0 0.0
  %1231 = vmatprep.mubr.f32.mxu0 0.0
  %v1232 = vand.u32 %v850, 4294901760
  %1233 = vmatmul.mubr.f32.gmra.mxu0 %v1232
  %v1234 = vpop.f32.mrf.mxu0
  %v1235 = vadd.f32 %v1158, %v1234
  %v1236 = vpop.f32.mrf.mxu0
  %1237 = vdwg.mxu0
  %1238 = vmatprep.subr.mxu0 0.0
  %1239 = vmatpush1.msra.mxu0 0.0
  %1240 = vmatprep.subr.mxu0 0.0
  %1241 = vmatpush1.msra.mxu0 0.0
  %1242 = vmatprep.subr.mxu0 0.0
  %1243 = vmatpush1.msra.mxu0 0.0
  %1244 = vmatprep.subr.mxu0 0.0
  %1245 = vmatpush1.msra.mxu0 0.0
  %1246 = vmatprep.subr.mxu0 0.0
  %1247 = vmatpush1.msra.mxu0 0.0
  %1248 = vmatprep.subr.mxu0 0.0
  %1249 = vmatpush1.msra.mxu0 0.0
  %1250 = vmatprep.subr.mxu0 0.0
  %1251 = vmatpush1.msra.mxu0 0.0
  %1252 = vmatprep.subr.mxu0 0.0
  %1253 = vmatpush1.msra.mxu0 0.0
  %1254 = vmatprep.subr.mxu0 0.0
  %1255 = vmatpush1.msra.mxu0 0.0
  %1256 = vmatprep.subr.mxu0 0.0
  %1257 = vmatpush1.msra.mxu0 0.0
  %1258 = vmatprep.subr.mxu0 0.0
  %1259 = vmatpush1.msra.mxu0 0.0
  %1260 = vmatprep.subr.mxu0 0.0
  %1261 = vmatpush1.msra.mxu0 0.0
  %1262 = vmatprep.subr.mxu0 0.0
  %1263 = vmatpush1.msra.mxu0 0.0
  %1264 = vmatprep.subr.mxu0 0.0
  %1265 = vmatpush1.msra.mxu0 0.0
  %1266 = vmatprep.subr.mxu0 0.0
  %v1267 = vand.u32 %v845, 4294901760
  %1268 = vmatpush1.msra.mxu0 %v1267
  %1269 = vmatprep.subr.mxu0 0.0
  %v1270 = vand.u32 %v844, 4294901760
  %1271 = vmatpush1.msra.mxu0 %v1270
  %1272 = vmatprep.subr.mxu0 0.0
  %1273 = vmatpush2.msra.mxu0 0.0
  %1274 = vmatprep.subr.mxu0 0.0
  %1275 = vmatpush2.msra.mxu0 0.0
  %1276 = vmatprep.subr.mxu0 0.0
  %1277 = vmatpush2.msra.mxu0 0.0
  %1278 = vmatprep.subr.mxu0 0.0
  %1279 = vmatpush2.msra.mxu0 0.0
  %1280 = vmatprep.subr.mxu0 0.0
  %1281 = vmatpush2.msra.mxu0 0.0
  %1282 = vmatprep.subr.mxu0 0.0
  %1283 = vmatpush2.msra.mxu0 0.0
  %1284 = vmatprep.subr.mxu0 0.0
  %1285 = vmatpush2.msra.mxu0 0.0
  %1286 = vmatprep.subr.mxu0 0.0
  %1287 = vmatpush2.msra.mxu0 0.0
  %1288 = vmatprep.subr.mxu0 0.0
  %1289 = vmatpush2.msra.mxu0 0.0
  %1290 = vmatprep.subr.mxu0 0.0
  %1291 = vmatpush2.msra.mxu0 0.0
  %1292 = vmatprep.subr.mxu0 0.0
  %1293 = vmatpush2.msra.mxu0 0.0
  %1294 = vmatprep.subr.mxu0 0.0
  %1295 = vmatpush2.msra.mxu0 0.0
  %1296 = vmatprep.subr.mxu0 0.0
  %1297 = vmatpush2.msra.mxu0 0.0
  %1298 = vmatprep.subr.mxu0 0.0
  %1299 = vmatpush2.msra.mxu0 0.0
  %1300 = vmatprep.subr.mxu0 0.0
  %1301 = vmatpush2.msra.mxu0 0.0
  %1302 = vmatprep.subr.mxu0 0.0
  %1303 = vmatpush2.msra.mxu0 0.0
  %1304 = vmatprep.mubr.f32.mxu0 0.0
  %v1305 = vand.u32 %v850, 4294901760
  %1306 = vmatmul.mubr.f32.gmra.mxu0 %v1305
  %v1307 = vpop.f32.mrf.mxu0
  %v1308 = vadd.f32 %v1235, %v1307
  %v1309 = vpop.f32.mrf.mxu0
  %1310 = vdwg.mxu0
  %v1311 = vadd.f32 %v847, %v1308
  %1312 = vst [vmem:[%s5] sm:$0xff] %v1311
  %v1313 = vld [vmem:[%s6] sm:$0xff]
  %1314 = vmatprep.subr.mxu0 0.0
  %1315 = vmatpush1.msra.mxu0 0.0
  %1316 = vmatprep.subr.mxu0 0.0
  %1317 = vmatpush1.msra.mxu0 0.0
  %1318 = vmatprep.subr.mxu0 0.0
  %1319 = vmatpush1.msra.mxu0 0.0
  %1320 = vmatprep.subr.mxu0 0.0
  %1321 = vmatpush1.msra.mxu0 0.0
  %1322 = vmatprep.subr.mxu0 0.0
  %1323 = vmatpush1.msra.mxu0 0.0
  %1324 = vmatprep.subr.mxu0 0.0
  %1325 = vmatpush1.msra.mxu0 0.0
  %1326 = vmatprep.subr.mxu0 0.0
  %1327 = vmatpush1.msra.mxu0 0.0
  %1328 = vmatprep.subr.mxu0 0.0
  %1329 = vmatpush1.msra.mxu0 0.0
  %1330 = vmatprep.subr.mxu0 0.0
  %1331 = vmatpush1.msra.mxu0 0.0
  %1332 = vmatprep.subr.mxu0 0.0
  %1333 = vmatpush1.msra.mxu0 0.0
  %1334 = vmatprep.subr.mxu0 0.0
  %1335 = vmatpush1.msra.mxu0 0.0
  %1336 = vmatprep.subr.mxu0 0.0
  %1337 = vmatpush1.msra.mxu0 0.0
  %1338 = vmatprep.subr.mxu0 0.0
  %1339 = vmatpush1.msra.mxu0 0.0
  %1340 = vmatprep.subr.mxu0 0.0
  %1341 = vmatpush1.msra.mxu0 0.0
  %1342 = vmatprep.subr.mxu0 0.0
  %v1343 = vand.u32 %v743, 4294901760
  %1344 = vmatpush1.msra.mxu0 %v1343
  %1345 = vmatprep.subr.mxu0 0.0
  %v1346 = vand.u32 %v741, 4294901760
  %1347 = vmatpush1.msra.mxu0 %v1346
  %1348 = vmatprep.subr.mxu0 0.0
  %1349 = vmatpush2.msra.mxu0 0.0
  %1350 = vmatprep.subr.mxu0 0.0
  %1351 = vmatpush2.msra.mxu0 0.0
  %1352 = vmatprep.subr.mxu0 0.0
  %1353 = vmatpush2.msra.mxu0 0.0
  %1354 = vmatprep.subr.mxu0 0.0
  %1355 = vmatpush2.msra.mxu0 0.0
  %1356 = vmatprep.subr.mxu0 0.0
  %1357 = vmatpush2.msra.mxu0 0.0
  %1358 = vmatprep.subr.mxu0 0.0
  %1359 = vmatpush2.msra.mxu0 0.0
  %1360 = vmatprep.subr.mxu0 0.0
  %1361 = vmatpush2.msra.mxu0 0.0
  %1362 = vmatprep.subr.mxu0 0.0
  %1363 = vmatpush2.msra.mxu0 0.0
  %1364 = vmatprep.subr.mxu0 0.0
  %1365 = vmatpush2.msra.mxu0 0.0
  %1366 = vmatprep.subr.mxu0 0.0
  %1367 = vmatpush2.msra.mxu0 0.0
  %1368 = vmatprep.subr.mxu0 0.0
  %1369 = vmatpush2.msra.mxu0 0.0
  %1370 = vmatprep.subr.mxu0 0.0
  %1371 = vmatpush2.msra.mxu0 0.0
  %1372 = vmatprep.subr.mxu0 0.0
  %1373 = vmatpush2.msra.mxu0 0.0
  %1374 = vmatprep.subr.mxu0 0.0
  %1375 = vmatpush2.msra.mxu0 0.0
  %1376 = vmatprep.subr.mxu0 0.0
  %1377 = vmatpush2.msra.mxu0 0.0
  %1378 = vmatprep.subr.mxu0 0.0
  %1379 = vmatpush2.msra.mxu0 0.0
  %1380 = vmatprep.mubr.f32.mxu0 0.0
  %v1381 = vand.u32 %v850, 4294901760
  %v1382 = vsub.f32 %v850, %v1381
  %v1383 = vand.u32 %v1382, 4294901760
  %v1384 = vsub.f32 %v1382, %v1383
  %v1385 = vand.u32 %v1384, 4294901760
  %1386 = vmatmul.mubr.f32.gmra.mxu0 %v1385
  %v1387 = vpop.f32.mrf.mxu0
  %v1388 = vadd.f32 0.0, %v1387
  %v1389 = vpop.f32.mrf.mxu0
  %1390 = vdwg.mxu0
  %1391 = vmatprep.subr.mxu0 0.0
  %1392 = vmatpush1.msra.mxu0 0.0
  %1393 = vmatprep.subr.mxu0 0.0
  %1394 = vmatpush1.msra.mxu0 0.0
  %1395 = vmatprep.subr.mxu0 0.0
  %1396 = vmatpush1.msra.mxu0 0.0
  %1397 = vmatprep.subr.mxu0 0.0
  %1398 = vmatpush1.msra.mxu0 0.0
  %1399 = vmatprep.subr.mxu0 0.0
  %1400 = vmatpush1.msra.mxu0 0.0
  %1401 = vmatprep.subr.mxu0 0.0
  %1402 = vmatpush1.msra.mxu0 0.0
  %1403 = vmatprep.subr.mxu0 0.0
  %1404 = vmatpush1.msra.mxu0 0.0
  %1405 = vmatprep.subr.mxu0 0.0
  %1406 = vmatpush1.msra.mxu0 0.0
  %1407 = vmatprep.subr.mxu0 0.0
  %1408 = vmatpush1.msra.mxu0 0.0
  %1409 = vmatprep.subr.mxu0 0.0
  %1410 = vmatpush1.msra.mxu0 0.0
  %1411 = vmatprep.subr.mxu0 0.0
  %1412 = vmatpush1.msra.mxu0 0.0
  %1413 = vmatprep.subr.mxu0 0.0
  %1414 = vmatpush1.msra.mxu0 0.0
  %1415 = vmatprep.subr.mxu0 0.0
  %1416 = vmatpush1.msra.mxu0 0.0
  %1417 = vmatprep.subr.mxu0 0.0
  %1418 = vmatpush1.msra.mxu0 0.0
  %1419 = vmatprep.subr.mxu0 0.0
  %v1420 = vand.u32 %v743, 4294901760
  %v1421 = vsub.f32 %v743, %v1420
  %v1422 = vand.u32 %v1421, 4294901760
  %v1423 = vsub.f32 %v1421, %v1422
  %v1424 = vand.u32 %v1423, 4294901760
  %1425 = vmatpush1.msra.mxu0 %v1424
  %1426 = vmatprep.subr.mxu0 0.0
  %v1427 = vand.u32 %v741, 4294901760
  %v1428 = vsub.f32 %v741, %v1427
  %v1429 = vand.u32 %v1428, 4294901760
  %v1430 = vsub.f32 %v1428, %v1429
  %v1431 = vand.u32 %v1430, 4294901760
  %1432 = vmatpush1.msra.mxu0 %v1431
  %1433 = vmatprep.subr.mxu0 0.0
  %1434 = vmatpush2.msra.mxu0 0.0
  %1435 = vmatprep.subr.mxu0 0.0
  %1436 = vmatpush2.msra.mxu0 0.0
  %1437 = vmatprep.subr.mxu0 0.0
  %1438 = vmatpush2.msra.mxu0 0.0
  %1439 = vmatprep.subr.mxu0 0.0
  %1440 = vmatpush2.msra.mxu0 0.0
  %1441 = vmatprep.subr.mxu0 0.0
  %1442 = vmatpush2.msra.mxu0 0.0
  %1443 = vmatprep.subr.mxu0 0.0
  %1444 = vmatpush2.msra.mxu0 0.0
  %1445 = vmatprep.subr.mxu0 0.0
  %1446 = vmatpush2.msra.mxu0 0.0
  %1447 = vmatprep.subr.mxu0 0.0
  %1448 = vmatpush2.msra.mxu0 0.0
  %1449 = vmatprep.subr.mxu0 0.0
  %1450 = vmatpush2.msra.mxu0 0.0
  %1451 = vmatprep.subr.mxu0 0.0
  %1452 = vmatpush2.msra.mxu0 0.0
  %1453 = vmatprep.subr.mxu0 0.0
  %1454 = vmatpush2.msra.mxu0 0.0
  %1455 = vmatprep.subr.mxu0 0.0
  %1456 = vmatpush2.msra.mxu0 0.0
  %1457 = vmatprep.subr.mxu0 0.0
  %1458 = vmatpush2.msra.mxu0 0.0
  %1459 = vmatprep.subr.mxu0 0.0
  %1460 = vmatpush2.msra.mxu0 0.0
  %1461 = vmatprep.subr.mxu0 0.0
  %1462 = vmatpush2.msra.mxu0 0.0
  %1463 = vmatprep.subr.mxu0 0.0
  %1464 = vmatpush2.msra.mxu0 0.0
  %1465 = vmatprep.mubr.f32.mxu0 0.0
  %v1466 = vand.u32 %v850, 4294901760
  %1467 = vmatmul.mubr.f32.gmra.mxu0 %v1466
  %v1468 = vpop.f32.mrf.mxu0
  %v1469 = vadd.f32 %v1388, %v1468
  %v1470 = vpop.f32.mrf.mxu0
  %1471 = vdwg.mxu0
  %1472 = vmatprep.subr.mxu0 0.0
  %1473 = vmatpush1.msra.mxu0 0.0
  %1474 = vmatprep.subr.mxu0 0.0
  %1475 = vmatpush1.msra.mxu0 0.0
  %1476 = vmatprep.subr.mxu0 0.0
  %1477 = vmatpush1.msra.mxu0 0.0
  %1478 = vmatprep.subr.mxu0 0.0
  %1479 = vmatpush1.msra.mxu0 0.0
  %1480 = vmatprep.subr.mxu0 0.0
  %1481 = vmatpush1.msra.mxu0 0.0
  %1482 = vmatprep.subr.mxu0 0.0
  %1483 = vmatpush1.msra.mxu0 0.0
  %1484 = vmatprep.subr.mxu0 0.0
  %1485 = vmatpush1.msra.mxu0 0.0
  %1486 = vmatprep.subr.mxu0 0.0
  %1487 = vmatpush1.msra.mxu0 0.0
  %1488 = vmatprep.subr.mxu0 0.0
  %1489 = vmatpush1.msra.mxu0 0.0
  %1490 = vmatprep.subr.mxu0 0.0
  %1491 = vmatpush1.msra.mxu0 0.0
  %1492 = vmatprep.subr.mxu0 0.0
  %1493 = vmatpush1.msra.mxu0 0.0
  %1494 = vmatprep.subr.mxu0 0.0
  %1495 = vmatpush1.msra.mxu0 0.0
  %1496 = vmatprep.subr.mxu0 0.0
  %1497 = vmatpush1.msra.mxu0 0.0
  %1498 = vmatprep.subr.mxu0 0.0
  %1499 = vmatpush1.msra.mxu0 0.0
  %1500 = vmatprep.subr.mxu0 0.0
  %v1501 = vand.u32 %v743, 4294901760
  %v1502 = vsub.f32 %v743, %v1501
  %1503 = vmatpush1.msra.mxu0 %v1502
  %1504 = vmatprep.subr.mxu0 0.0
  %v1505 = vand.u32 %v741, 4294901760
  %v1506 = vsub.f32 %v741, %v1505
  %1507 = vmatpush1.msra.mxu0 %v1506
  %1508 = vmatprep.subr.mxu0 0.0
  %1509 = vmatpush2.msra.mxu0 0.0
  %1510 = vmatprep.subr.mxu0 0.0
  %1511 = vmatpush2.msra.mxu0 0.0
  %1512 = vmatprep.subr.mxu0 0.0
  %1513 = vmatpush2.msra.mxu0 0.0
  %1514 = vmatprep.subr.mxu0 0.0
  %1515 = vmatpush2.msra.mxu0 0.0
  %1516 = vmatprep.subr.mxu0 0.0
  %1517 = vmatpush2.msra.mxu0 0.0
  %1518 = vmatprep.subr.mxu0 0.0
  %1519 = vmatpush2.msra.mxu0 0.0
  %1520 = vmatprep.subr.mxu0 0.0
  %1521 = vmatpush2.msra.mxu0 0.0
  %1522 = vmatprep.subr.mxu0 0.0
  %1523 = vmatpush2.msra.mxu0 0.0
  %1524 = vmatprep.subr.mxu0 0.0
  %1525 = vmatpush2.msra.mxu0 0.0
  %1526 = vmatprep.subr.mxu0 0.0
  %1527 = vmatpush2.msra.mxu0 0.0
  %1528 = vmatprep.subr.mxu0 0.0
  %1529 = vmatpush2.msra.mxu0 0.0
  %1530 = vmatprep.subr.mxu0 0.0
  %1531 = vmatpush2.msra.mxu0 0.0
  %1532 = vmatprep.subr.mxu0 0.0
  %1533 = vmatpush2.msra.mxu0 0.0
  %1534 = vmatprep.subr.mxu0 0.0
  %1535 = vmatpush2.msra.mxu0 0.0
  %1536 = vmatprep.subr.mxu0 0.0
  %1537 = vmatpush2.msra.mxu0 0.0
  %1538 = vmatprep.subr.mxu0 0.0
  %1539 = vmatpush2.msra.mxu0 0.0
  %1540 = vmatprep.mubr.f32.mxu0 0.0
  %v1541 = vand.u32 %v850, 4294901760
  %v1542 = vsub.f32 %v850, %v1541
  %1543 = vmatmul.mubr.f32.gmra.mxu0 %v1542
  %v1544 = vpop.f32.mrf.mxu0
  %v1545 = vadd.f32 %v1469, %v1544
  %v1546 = vpop.f32.mrf.mxu0
  %1547 = vdwg.mxu0
  %1548 = vmatprep.subr.mxu0 0.0
  %1549 = vmatpush1.msra.mxu0 0.0
  %1550 = vmatprep.subr.mxu0 0.0
  %1551 = vmatpush1.msra.mxu0 0.0
  %1552 = vmatprep.subr.mxu0 0.0
  %1553 = vmatpush1.msra.mxu0 0.0
  %1554 = vmatprep.subr.mxu0 0.0
  %1555 = vmatpush1.msra.mxu0 0.0
  %1556 = vmatprep.subr.mxu0 0.0
  %1557 = vmatpush1.msra.mxu0 0.0
  %1558 = vmatprep.subr.mxu0 0.0
  %1559 = vmatpush1.msra.mxu0 0.0
  %1560 = vmatprep.subr.mxu0 0.0
  %1561 = vmatpush1.msra.mxu0 0.0
  %1562 = vmatprep.subr.mxu0 0.0
  %1563 = vmatpush1.msra.mxu0 0.0
  %1564 = vmatprep.subr.mxu0 0.0
  %1565 = vmatpush1.msra.mxu0 0.0
  %1566 = vmatprep.subr.mxu0 0.0
  %1567 = vmatpush1.msra.mxu0 0.0
  %1568 = vmatprep.subr.mxu0 0.0
  %1569 = vmatpush1.msra.mxu0 0.0
  %1570 = vmatprep.subr.mxu0 0.0
  %1571 = vmatpush1.msra.mxu0 0.0
  %1572 = vmatprep.subr.mxu0 0.0
  %1573 = vmatpush1.msra.mxu0 0.0
  %1574 = vmatprep.subr.mxu0 0.0
  %1575 = vmatpush1.msra.mxu0 0.0
  %1576 = vmatprep.subr.mxu0 0.0
  %v1577 = vand.u32 %v743, 4294901760
  %1578 = vmatpush1.msra.mxu0 %v1577
  %1579 = vmatprep.subr.mxu0 0.0
  %v1580 = vand.u32 %v741, 4294901760
  %1581 = vmatpush1.msra.mxu0 %v1580
  %1582 = vmatprep.subr.mxu0 0.0
  %1583 = vmatpush2.msra.mxu0 0.0
  %1584 = vmatprep.subr.mxu0 0.0
  %1585 = vmatpush2.msra.mxu0 0.0
  %1586 = vmatprep.subr.mxu0 0.0
  %1587 = vmatpush2.msra.mxu0 0.0
  %1588 = vmatprep.subr.mxu0 0.0
  %1589 = vmatpush2.msra.mxu0 0.0
  %1590 = vmatprep.subr.mxu0 0.0
  %1591 = vmatpush2.msra.mxu0 0.0
  %1592 = vmatprep.subr.mxu0 0.0
  %1593 = vmatpush2.msra.mxu0 0.0
  %1594 = vmatprep.subr.mxu0 0.0
  %1595 = vmatpush2.msra.mxu0 0.0
  %1596 = vmatprep.subr.mxu0 0.0
  %1597 = vmatpush2.msra.mxu0 0.0
  %1598 = vmatprep.subr.mxu0 0.0
  %1599 = vmatpush2.msra.mxu0 0.0
  %1600 = vmatprep.subr.mxu0 0.0
  %1601 = vmatpush2.msra.mxu0 0.0
  %1602 = vmatprep.subr.mxu0 0.0
  %1603 = vmatpush2.msra.mxu0 0.0
  %1604 = vmatprep.subr.mxu0 0.0
  %1605 = vmatpush2.msra.mxu0 0.0
  %1606 = vmatprep.subr.mxu0 0.0
  %1607 = vmatpush2.msra.mxu0 0.0
  %1608 = vmatprep.subr.mxu0 0.0
  %1609 = vmatpush2.msra.mxu0 0.0
  %1610 = vmatprep.subr.mxu0 0.0
  %1611 = vmatpush2.msra.mxu0 0.0
  %1612 = vmatprep.subr.mxu0 0.0
  %1613 = vmatpush2.msra.mxu0 0.0
  %1614 = vmatprep.mubr.f32.mxu0 0.0
  %v1615 = vand.u32 %v850, 4294901760
  %v1616 = vsub.f32 %v850, %v1615
  %v1617 = vand.u32 %v1616, 4294901760
  %1618 = vmatmul.mubr.f32.gmra.mxu0 %v1617
  %v1619 = vpop.f32.mrf.mxu0
  %v1620 = vadd.f32 %v1545, %v1619
  %v1621 = vpop.f32.mrf.mxu0
  %1622 = vdwg.mxu0
  %1623 = vmatprep.subr.mxu0 0.0
  %1624 = vmatpush1.msra.mxu0 0.0
  %1625 = vmatprep.subr.mxu0 0.0
  %1626 = vmatpush1.msra.mxu0 0.0
  %1627 = vmatprep.subr.mxu0 0.0
  %1628 = vmatpush1.msra.mxu0 0.0
  %1629 = vmatprep.subr.mxu0 0.0
  %1630 = vmatpush1.msra.mxu0 0.0
  %1631 = vmatprep.subr.mxu0 0.0
  %1632 = vmatpush1.msra.mxu0 0.0
  %1633 = vmatprep.subr.mxu0 0.0
  %1634 = vmatpush1.msra.mxu0 0.0
  %1635 = vmatprep.subr.mxu0 0.0
  %1636 = vmatpush1.msra.mxu0 0.0
  %1637 = vmatprep.subr.mxu0 0.0
  %1638 = vmatpush1.msra.mxu0 0.0
  %1639 = vmatprep.subr.mxu0 0.0
  %1640 = vmatpush1.msra.mxu0 0.0
  %1641 = vmatprep.subr.mxu0 0.0
  %1642 = vmatpush1.msra.mxu0 0.0
  %1643 = vmatprep.subr.mxu0 0.0
  %1644 = vmatpush1.msra.mxu0 0.0
  %1645 = vmatprep.subr.mxu0 0.0
  %1646 = vmatpush1.msra.mxu0 0.0
  %1647 = vmatprep.subr.mxu0 0.0
  %1648 = vmatpush1.msra.mxu0 0.0
  %1649 = vmatprep.subr.mxu0 0.0
  %1650 = vmatpush1.msra.mxu0 0.0
  %1651 = vmatprep.subr.mxu0 0.0
  %v1652 = vand.u32 %v743, 4294901760
  %v1653 = vsub.f32 %v743, %v1652
  %v1654 = vand.u32 %v1653, 4294901760
  %1655 = vmatpush1.msra.mxu0 %v1654
  %1656 = vmatprep.subr.mxu0 0.0
  %v1657 = vand.u32 %v741, 4294901760
  %v1658 = vsub.f32 %v741, %v1657
  %v1659 = vand.u32 %v1658, 4294901760
  %1660 = vmatpush1.msra.mxu0 %v1659
  %1661 = vmatprep.subr.mxu0 0.0
  %1662 = vmatpush2.msra.mxu0 0.0
  %1663 = vmatprep.subr.mxu0 0.0
  %1664 = vmatpush2.msra.mxu0 0.0
  %1665 = vmatprep.subr.mxu0 0.0
  %1666 = vmatpush2.msra.mxu0 0.0
  %1667 = vmatprep.subr.mxu0 0.0
  %1668 = vmatpush2.msra.mxu0 0.0
  %1669 = vmatprep.subr.mxu0 0.0
  %1670 = vmatpush2.msra.mxu0 0.0
  %1671 = vmatprep.subr.mxu0 0.0
  %1672 = vmatpush2.msra.mxu0 0.0
  %1673 = vmatprep.subr.mxu0 0.0
  %1674 = vmatpush2.msra.mxu0 0.0
  %1675 = vmatprep.subr.mxu0 0.0
  %1676 = vmatpush2.msra.mxu0 0.0
  %1677 = vmatprep.subr.mxu0 0.0
  %1678 = vmatpush2.msra.mxu0 0.0
  %1679 = vmatprep.subr.mxu0 0.0
  %1680 = vmatpush2.msra.mxu0 0.0
  %1681 = vmatprep.subr.mxu0 0.0
  %1682 = vmatpush2.msra.mxu0 0.0
  %1683 = vmatprep.subr.mxu0 0.0
  %1684 = vmatpush2.msra.mxu0 0.0
  %1685 = vmatprep.subr.mxu0 0.0
  %1686 = vmatpush2.msra.mxu0 0.0
  %1687 = vmatprep.subr.mxu0 0.0
  %1688 = vmatpush2.msra.mxu0 0.0
  %1689 = vmatprep.subr.mxu0 0.0
  %1690 = vmatpush2.msra.mxu0 0.0
  %1691 = vmatprep.subr.mxu0 0.0
  %1692 = vmatpush2.msra.mxu0 0.0
  %1693 = vmatprep.mubr.f32.mxu0 0.0
  %v1694 = vand.u32 %v850, 4294901760
  %1695 = vmatmul.mubr.f32.gmra.mxu0 %v1694
  %v1696 = vpop.f32.mrf.mxu0
  %v1697 = vadd.f32 %v1620, %v1696
  %v1698 = vpop.f32.mrf.mxu0
  %1699 = vdwg.mxu0
  %1700 = vmatprep.subr.mxu0 0.0
  %1701 = vmatpush1.msra.mxu0 0.0
  %1702 = vmatprep.subr.mxu0 0.0
  %1703 = vmatpush1.msra.mxu0 0.0
  %1704 = vmatprep.subr.mxu0 0.0
  %1705 = vmatpush1.msra.mxu0 0.0
  %1706 = vmatprep.subr.mxu0 0.0
  %1707 = vmatpush1.msra.mxu0 0.0
  %1708 = vmatprep.subr.mxu0 0.0
  %1709 = vmatpush1.msra.mxu0 0.0
  %1710 = vmatprep.subr.mxu0 0.0
  %1711 = vmatpush1.msra.mxu0 0.0
  %1712 = vmatprep.subr.mxu0 0.0
  %1713 = vmatpush1.msra.mxu0 0.0
  %1714 = vmatprep.subr.mxu0 0.0
  %1715 = vmatpush1.msra.mxu0 0.0
  %1716 = vmatprep.subr.mxu0 0.0
  %1717 = vmatpush1.msra.mxu0 0.0
  %1718 = vmatprep.subr.mxu0 0.0
  %1719 = vmatpush1.msra.mxu0 0.0
  %1720 = vmatprep.subr.mxu0 0.0
  %1721 = vmatpush1.msra.mxu0 0.0
  %1722 = vmatprep.subr.mxu0 0.0
  %1723 = vmatpush1.msra.mxu0 0.0
  %1724 = vmatprep.subr.mxu0 0.0
  %1725 = vmatpush1.msra.mxu0 0.0
  %1726 = vmatprep.subr.mxu0 0.0
  %1727 = vmatpush1.msra.mxu0 0.0
  %1728 = vmatprep.subr.mxu0 0.0
  %v1729 = vand.u32 %v743, 4294901760
  %1730 = vmatpush1.msra.mxu0 %v1729
  %1731 = vmatprep.subr.mxu0 0.0
  %v1732 = vand.u32 %v741, 4294901760
  %1733 = vmatpush1.msra.mxu0 %v1732
  %1734 = vmatprep.subr.mxu0 0.0
  %1735 = vmatpush2.msra.mxu0 0.0
  %1736 = vmatprep.subr.mxu0 0.0
  %1737 = vmatpush2.msra.mxu0 0.0
  %1738 = vmatprep.subr.mxu0 0.0
  %1739 = vmatpush2.msra.mxu0 0.0
  %1740 = vmatprep.subr.mxu0 0.0
  %1741 = vmatpush2.msra.mxu0 0.0
  %1742 = vmatprep.subr.mxu0 0.0
  %1743 = vmatpush2.msra.mxu0 0.0
  %1744 = vmatprep.subr.mxu0 0.0
  %1745 = vmatpush2.msra.mxu0 0.0
  %1746 = vmatprep.subr.mxu0 0.0
  %1747 = vmatpush2.msra.mxu0 0.0
  %1748 = vmatprep.subr.mxu0 0.0
  %1749 = vmatpush2.msra.mxu0 0.0
  %1750 = vmatprep.subr.mxu0 0.0
  %1751 = vmatpush2.msra.mxu0 0.0
  %1752 = vmatprep.subr.mxu0 0.0
  %1753 = vmatpush2.msra.mxu0 0.0
  %1754 = vmatprep.subr.mxu0 0.0
  %1755 = vmatpush2.msra.mxu0 0.0
  %1756 = vmatprep.subr.mxu0 0.0
  %1757 = vmatpush2.msra.mxu0 0.0
  %1758 = vmatprep.subr.mxu0 0.0
  %1759 = vmatpush2.msra.mxu0 0.0
  %1760 = vmatprep.subr.mxu0 0.0
  %1761 = vmatpush2.msra.mxu0 0.0
  %1762 = vmatprep.subr.mxu0 0.0
  %1763 = vmatpush2.msra.mxu0 0.0
  %1764 = vmatprep.subr.mxu0 0.0
  %1765 = vmatpush2.msra.mxu0 0.0
  %1766 = vmatprep.mubr.f32.mxu0 0.0
  %v1767 = vand.u32 %v850, 4294901760
  %1768 = vmatmul.mubr.f32.gmra.mxu0 %v1767
  %v1769 = vpop.f32.mrf.mxu0
  %v1770 = vadd.f32 %v1697, %v1769
  %v1771 = vpop.f32.mrf.mxu0
  %1772 = vdwg.mxu0
  %v1773 = vadd.f32 %v1313, %v1770
  %1774 = vst [vmem:[%s6] sm:$0xff] %v1773
  // Predicated region
  $region26: #{f1_loss.1} parent=0 // pred_check
    _
  $region27: #{f1_loss.1} parent=0 // pred_check_branch
    %1776 = sbr.rel (0) target = $region29
  $region28: #{f1_loss.1} parent=0 // pred_region
    _
  $region29: #{f1_loss.1} parent=0 // pred_fallthru
    _
  // Predicated region
  $region30: #{f1_loss.1} parent=0 // pred_check
    _
  $region31: #{f1_loss.1} parent=0 // pred_check_branch
    %1778 = sbr.rel (0) target = $region33
  $region32: #{f1_loss.1} parent=0 // pred_region
    _
  $region33: #{f1_loss.1} parent=0 // pred_fallthru
    _
  // Predicated region
  $region34: #{f1_loss.1} parent=0 // pred_check
    _
  $region35: #{f1_loss.1} parent=0 // pred_check_branch
    %1780 = sbr.rel (0) target = $region37
  $region36: #{f1_loss.1} parent=0 // pred_region
    _
  $region37: #{f1_loss.1} parent=0 // pred_fallthru
    _
  // Predicated region
  $region38: #{f1_loss.1} parent=0 // pred_check
    _
  $region39: #{f1_loss.1} parent=0 // pred_check_branch
    %1782 = sbr.rel (0) target = $region41
  $region40: #{f1_loss.1} parent=0 // pred_region
    _
  $region41: #{f1_loss.1} parent=0 // pred_fallthru
    _

</llo_original>
